<compile_context>
chip_gen: v6e
topology: v6e:2x2x1
jax: 0.10.0
libtpu: 0.0.40
codegen_flags: <defaults>
</compile_context>

<pallas_src>
import functools

import jax
import jax.numpy as jnp
from jax.experimental import pallas as pl
from jax.experimental.pallas import tpu as pltpu


# ----------------------------------------------------------------------------
# Pallas kernel: fused  W @ X + b  (+ activation)
# ----------------------------------------------------------------------------
def _matmul_bias_act_kernel(w_ref, x_ref, b_ref, o_ref, *, act):
    y = jnp.dot(w_ref[...], x_ref[...], preferred_element_type=jnp.float32)
    y = y + b_ref[...]                      # (Cout, 1) broadcast along lanes
    if act == "relu":
        y = jnp.maximum(y, 0.0)
    elif act == "lrelu":
        y = jnp.where(y > 0, y, 0.2 * y)
    elif act == "sigmoid":
        y = jax.nn.sigmoid(y)
    o_ref[...] = y.astype(o_ref.dtype)


def matmul_bias_act(w, x, b, act="none"):
    """w: (Cout, K) bf16   x: (K, M) bf16   b: (Cout, 1) f32  ->  (Cout, M) f32.

    The whole problem fits in one VMEM block at these sizes (K <= 288,
    M <= 512), so no grid is used.  Block dims equal the full array dims, so
    Mosaic pads the un-aligned dims in VMEM at no HBM cost.
    """
    Cout, K = w.shape
    K2, M = x.shape
    assert K == K2 and b.shape == (Cout, 1)
    vmem = pl.BlockSpec(memory_space=pltpu.MemorySpace.VMEM)
    return pl.pallas_call(
        functools.partial(_matmul_bias_act_kernel, act=act),
        out_shape=jax.ShapeDtypeStruct((Cout, M), jnp.float32),
        in_specs=[vmem, vmem, vmem],
        out_specs=vmem,
    )(w, x, b)


# ----------------------------------------------------------------------------
# Conv wrappers (channel-major; im2col glue in jnp, matmul in the Pallas kernel)
# ----------------------------------------------------------------------------
def conv2d_cm(x, w, b, stride=1, padding=0, act="none"):
    """Channel-major conv.
    x: (Cin, N, H, W)   w: (Cout, Cin, KH, KW)   b: (Cout,)  -> (Cout, N, OH, OW)
    """
    Cin, N, H, W = x.shape
    Cout, Cin2, KH, KW = w.shape
    assert Cin == Cin2
    OH = (H + 2 * padding - KH) // stride + 1
    OW = (W + 2 * padding - KW) // stride + 1

    xb = x.astype(jnp.bfloat16)             # bf16 MXU inputs, f32 accumulation
    if padding:
        xb = jnp.pad(xb, ((0, 0), (0, 0), (padding, padding), (padding, padding)))

    if KH == 1 and KW == 1 and stride == 1:
        cols = xb.reshape(Cin, N * OH * OW)
    else:
        taps = []
        for kh in range(KH):
            for kw in range(KW):
                taps.append(
                    xb[:, :, kh:kh + stride * (OH - 1) + 1:stride,
                             kw:kw + stride * (OW - 1) + 1:stride]
                )
        # K ordered as (cin, kh, kw) to match w.reshape(Cout, Cin*KH*KW)
        cols = jnp.stack(taps, axis=1).reshape(Cin * KH * KW, N * OH * OW)

    wm = w.reshape(Cout, Cin * KH * KW).astype(jnp.bfloat16)
    y = matmul_bias_act(wm, cols, b[:, None], act=act)     # (Cout, N*OH*OW)
    return y.reshape(Cout, N, OH, OW)


def conv_transpose2x2_cm(x, w, b):
    """ConvTranspose2d(kernel=2, stride=2), channel-major.
    x: (Cin, N, H, W)   w: (Cin, Cout, 2, 2) (PyTorch layout)   b: (Cout,)
    -> (Cout, N, 2H, 2W)
    """
    Cin, N, H, W = x.shape
    Cout = w.shape[1]
    wm = w.transpose(1, 2, 3, 0).reshape(Cout * 4, Cin).astype(jnp.bfloat16)
    xm = x.astype(jnp.bfloat16).reshape(Cin, N * H * W)
    b4 = jnp.repeat(b, 4)[:, None]          # kernel==stride -> each pixel gets bias once
    y = matmul_bias_act(wm, xm, b4, act="none")             # (Cout*4, N*H*W)
    y = y.reshape(Cout, 2, 2, N, H, W).transpose(0, 3, 4, 1, 5, 2)
    return y.reshape(Cout, N, 2 * H, 2 * W)


def maxpool2x2_cm(x):
    """2x2 max-pool, stride 2, channel-major (C, N, H, W).
    Done in jnp glue: the tensor is ~64 KB and a standalone Pallas call here was
    measured as pure overhead (4 HBM copies + 8/128-lane stores)."""
    return jnp.maximum(
        jnp.maximum(x[:, :, 0::2, 0::2], x[:, :, 0::2, 1::2]),
        jnp.maximum(x[:, :, 1::2, 0::2], x[:, :, 1::2, 1::2]),
    )


# ----------------------------------------------------------------------------
# Parameters (deterministic synthetic init)
# ----------------------------------------------------------------------------
def _conv_params(key, cout, cin, kh, kw):
    k1, k2 = jax.random.split(key)
    fan_in = cin * kh * kw
    w = jax.random.normal(k1, (cout, cin, kh, kw), jnp.float32) / jnp.sqrt(fan_in)
    b = 0.01 * jax.random.normal(k2, (cout,), jnp.float32)
    return w, b


def init_cgan_params(key, in_channels_g, in_channels_d, out_channels_g, base=16):
    keys = jax.random.split(key, 12)
    p = {}
    # Generator (small UNet, bilinear=False)
    p["inc_w1"], p["inc_b1"] = _conv_params(keys[0], base, in_channels_g, 3, 3)
    p["inc_w2"], p["inc_b2"] = _conv_params(keys[1], base, base, 3, 3)
    p["d1_w1"], p["d1_b1"] = _conv_params(keys[2], 2 * base, base, 3, 3)
    p["d1_w2"], p["d1_b2"] = _conv_params(keys[3], 2 * base, 2 * base, 3, 3)
    # ConvTranspose2d(2*base -> base, k=2, s=2); PyTorch weight layout (Cin, Cout, 2, 2)
    k1, k2 = jax.random.split(keys[4])
    fan_in = 2 * base * 2 * 2
    p["up_w"] = jax.random.normal(k1, (2 * base, base, 2, 2), jnp.float32) / jnp.sqrt(fan_in)
    p["up_b"] = 0.01 * jax.random.normal(k2, (base,), jnp.float32)
    p["u1_w1"], p["u1_b1"] = _conv_params(keys[6], base, 2 * base, 3, 3)
    p["u1_w2"], p["u1_b2"] = _conv_params(keys[7], base, base, 3, 3)
    p["out_w"], p["out_b"] = _conv_params(keys[8], out_channels_g, base, 1, 1)
    # Discriminator (PatchGAN-style)
    p["dc1_w"], p["dc1_b"] = _conv_params(keys[9], base, in_channels_d, 3, 3)
    p["dc2_w"], p["dc2_b"] = _conv_params(keys[10], 2 * base, base, 3, 3)
    p["dc3_w"], p["dc3_b"] = _conv_params(keys[11], 1, 2 * base, 1, 1)
    return p


# ----------------------------------------------------------------------------
# Forward passes (all activations kept channel-major: (C, N, H, W))
# ----------------------------------------------------------------------------
def generator_forward_cm(p, x):
    x1 = conv2d_cm(x, p["inc_w1"], p["inc_b1"], 1, 1, "relu")
    x1 = conv2d_cm(x1, p["inc_w2"], p["inc_b2"], 1, 1, "relu")
    x2 = maxpool2x2_cm(x1)
    x2 = conv2d_cm(x2, p["d1_w1"], p["d1_b1"], 1, 1, "relu")
    x2 = conv2d_cm(x2, p["d1_w2"], p["d1_b2"], 1, 1, "relu")
    u = conv_transpose2x2_cm(x2, p["up_w"], p["up_b"])
    u = jnp.concatenate([x1, u], axis=0)                    # channel axis = 0
    u = conv2d_cm(u, p["u1_w1"], p["u1_b1"], 1, 1, "relu")
    u = conv2d_cm(u, p["u1_w2"], p["u1_b2"], 1, 1, "relu")
    return conv2d_cm(u, p["out_w"], p["out_b"], 1, 0, "none")


def discriminator_forward_cm(p, x):
    h = conv2d_cm(x, p["dc1_w"], p["dc1_b"], 2, 1, "lrelu")
    h = conv2d_cm(h, p["dc2_w"], p["dc2_b"], 2, 1, "lrelu")
    return conv2d_cm(h, p["dc3_w"], p["dc3_b"], 1, 0, "sigmoid")


def cgan_forward(p, mmwave, real_speech):
    B = mmwave.shape[0]
    mm_cm = jnp.transpose(mmwave, (1, 0, 2, 3))             # (Cg, B, H, W)
    sp_cm = jnp.transpose(real_speech, (1, 0, 2, 3))        # (Cs, B, H, W)

    enh_cm = generator_forward_cm(p, mm_cm)                 # (Cs, B, H, W)
    enhanced_speech = jnp.transpose(enh_cm, (1, 0, 2, 3))   # back to NCHW

    # Batch the real / fake discriminator passes into one call:
    # channels = cat(mmwave, speech) along axis 0; batch = [real..., fake...]
    real_in = jnp.concatenate([mm_cm, sp_cm], axis=0)       # (Cd, B, H, W)
    fake_in = jnp.concatenate([mm_cm, enh_cm], axis=0)      # (Cd, B, H, W)
    disc_in = jnp.concatenate([real_in, fake_in], axis=1)   # (Cd, 2B, H, W)

    d_out = discriminator_forward_cm(p, disc_in)            # (1, 2B, OH, OW)
    d_out = jnp.transpose(d_out, (1, 0, 2, 3))              # (2B, 1, OH, OW)
    real_output = d_out[:B]
    fake_output = d_out[B:]
    return enhanced_speech, real_output, fake_output


# ----------------------------------------------------------------------------
if __name__ == "__main__":
    key = jax.random.PRNGKey(0)
    k_param, k_mm, k_sp = jax.random.split(key, 3)

    B, Cg, H, W = 2, 4, 16, 16        # mmwave: in_channels_g = 4
    Cout_g = 2                        # out_channels_g = 2 (= speech channels)
    Cd = Cg + Cout_g                  # discriminator input channels = 6

    params = init_cgan_params(k_param, Cg, Cd, Cout_g, base=16)

    mmwave = jax.random.normal(k_mm, (B, Cg, H, W), jnp.float32)
    real_speech = jax.random.normal(k_sp, (B, Cout_g, H, W), jnp.float32)

    fwd = jax.jit(cgan_forward)
    enhanced, real_out, fake_out = jax.block_until_ready(
        fwd(params, mmwave, real_speech)
    )

    assert enhanced.shape == (B, Cout_g, H, W)
    assert real_out.shape == (B, 1, H // 4, W // 4)
    assert fake_out.shape == (B, 1, H // 4, W // 4)
    assert bool(jnp.all(jnp.isfinite(enhanced)))
    assert bool(jnp.all((real_out >= 0) & (real_out <= 1)))
    print("KERNEL_OK")
</pallas_src>

<mosaic_0001>
module attributes {stable_mosaic.version = 11 : i64} {
  func.func @_matmul_bias_act_kernel(%arg0: memref<16x36xbf16, #tpu.memory_space<vmem>>, %arg1: memref<36x512xbf16, #tpu.memory_space<vmem>>, %arg2: memref<16x1xf32, #tpu.memory_space<vmem>>, %arg3: memref<16x512xf32, #tpu.memory_space<vmem>>) attributes {dimension_semantics = [], scalar_prefetch = 0 : i64, scratch_operands = 0 : i64, tpu.core_type = #tpu.core_type<tc>} {
    %c0 = arith.constant 0 : index
    %c0_0 = arith.constant 0 : index
    %0 = vector.load %arg0[%c0, %c0_0] : memref<16x36xbf16, #tpu.memory_space<vmem>>, vector<16x36xbf16>
    %c0_1 = arith.constant 0 : index
    %c0_2 = arith.constant 0 : index
    %1 = vector.load %arg1[%c0_1, %c0_2] : memref<36x512xbf16, #tpu.memory_space<vmem>>, vector<36x512xbf16>
    %cst = arith.constant dense<0.000000e+00> : vector<16x512xf32>
    %2 = tpu.matmul %0, %1, %cst {dimension_numbers = #tpu.dot_dimension_numbers<[1], [0], [0], [1], [0, 0, 1, 1], [], []>} : vector<16x36xbf16>, vector<36x512xbf16>, vector<16x512xf32> -> vector<16x512xf32>
    %c0_3 = arith.constant 0 : index
    %c0_4 = arith.constant 0 : index
    %3 = vector.load %arg2[%c0_3, %c0_4] : memref<16x1xf32, #tpu.memory_space<vmem>>, vector<16x1xf32>
    %4 = vector.broadcast %3 : vector<16x1xf32> to vector<16x512xf32>
    %5 = arith.addf %2, %4 : vector<16x512xf32>
    %cst_5 = arith.constant 0.000000e+00 : f32
    %6 = vector.broadcast %cst_5 : f32 to vector<16x512xf32>
    %7 = arith.maximumf %5, %6 : vector<16x512xf32>
    %c0_6 = arith.constant 0 : index
    %c0_7 = arith.constant 0 : index
    %8 = vector.load %arg3[%c0_6, %c0_7] : memref<16x512xf32, #tpu.memory_space<vmem>>, vector<16x512xf32>
    tpu.vector_store %arg3[%c0_6, %c0_7], %7 {strides = array<i32>} : memref<16x512xf32, #tpu.memory_space<vmem>>, vector<16x512xf32>,
    return
  }
}

module attributes {stable_mosaic.version = 11 : i64} {
  func.func @_matmul_bias_act_kernel(%arg0: memref<16x144xbf16, #tpu.memory_space<vmem>>, %arg1: memref<144x512xbf16, #tpu.memory_space<vmem>>, %arg2: memref<16x1xf32, #tpu.memory_space<vmem>>, %arg3: memref<16x512xf32, #tpu.memory_space<vmem>>) attributes {dimension_semantics = [], scalar_prefetch = 0 : i64, scratch_operands = 0 : i64, tpu.core_type = #tpu.core_type<tc>} {
    %c0 = arith.constant 0 : index
    %c0_0 = arith.constant 0 : index
    %0 = vector.load %arg0[%c0, %c0_0] : memref<16x144xbf16, #tpu.memory_space<vmem>>, vector<16x144xbf16>
    %c0_1 = arith.constant 0 : index
    %c0_2 = arith.constant 0 : index
    %1 = vector.load %arg1[%c0_1, %c0_2] : memref<144x512xbf16, #tpu.memory_space<vmem>>, vector<144x512xbf16>
    %cst = arith.constant dense<0.000000e+00> : vector<16x512xf32>
    %2 = tpu.matmul %0, %1, %cst {dimension_numbers = #tpu.dot_dimension_numbers<[1], [0], [0], [1], [0, 0, 1, 1], [], []>} : vector<16x144xbf16>, vector<144x512xbf16>, vector<16x512xf32> -> vector<16x512xf32>
    %c0_3 = arith.constant 0 : index
    %c0_4 = arith.constant 0 : index
    %3 = vector.load %arg2[%c0_3, %c0_4] : memref<16x1xf32, #tpu.memory_space<vmem>>, vector<16x1xf32>
    %4 = vector.broadcast %3 : vector<16x1xf32> to vector<16x512xf32>
    %5 = arith.addf %2, %4 : vector<16x512xf32>
    %cst_5 = arith.constant 0.000000e+00 : f32
    %6 = vector.broadcast %cst_5 : f32 to vector<16x512xf32>
    %7 = arith.maximumf %5, %6 : vector<16x512xf32>
    %c0_6 = arith.constant 0 : index
    %c0_7 = arith.constant 0 : index
    %8 = vector.load %arg3[%c0_6, %c0_7] : memref<16x512xf32, #tpu.memory_space<vmem>>, vector<16x512xf32>
    tpu.vector_store %arg3[%c0_6, %c0_7], %7 {strides = array<i32>} : memref<16x512xf32, #tpu.memory_space<vmem>>, vector<16x512xf32>,
    return
  }
}

module attributes {stable_mosaic.version = 11 : i64} {
  func.func @_matmul_bias_act_kernel(%arg0: memref<32x144xbf16, #tpu.memory_space<vmem>>, %arg1: memref<144x128xbf16, #tpu.memory_space<vmem>>, %arg2: memref<32x1xf32, #tpu.memory_space<vmem>>, %arg3: memref<32x128xf32, #tpu.memory_space<vmem>>) attributes {dimension_semantics = [], scalar_prefetch = 0 : i64, scratch_operands = 0 : i64, tpu.core_type = #tpu.core_type<tc>} {
    %c0 = arith.constant 0 : index
    %c0_0 = arith.constant 0 : index
    %0 = vector.load %arg0[%c0, %c0_0] : memref<32x144xbf16, #tpu.memory_space<vmem>>, vector<32x144xbf16>
    %c0_1 = arith.constant 0 : index
    %c0_2 = arith.constant 0 : index
    %1 = vector.load %arg1[%c0_1, %c0_2] : memref<144x128xbf16, #tpu.memory_space<vmem>>, vector<144x128xbf16>
    %cst = arith.constant dense<0.000000e+00> : vector<32x128xf32>
    %2 = tpu.matmul %0, %1, %cst {dimension_numbers = #tpu.dot_dimension_numbers<[1], [0], [0], [1], [0, 0, 1, 1], [], []>} : vector<32x144xbf16>, vector<144x128xbf16>, vector<32x128xf32> -> vector<32x128xf32>
    %c0_3 = arith.constant 0 : index
    %c0_4 = arith.constant 0 : index
    %3 = vector.load %arg2[%c0_3, %c0_4] : memref<32x1xf32, #tpu.memory_space<vmem>>, vector<32x1xf32>
    %4 = vector.broadcast %3 : vector<32x1xf32> to vector<32x128xf32>
    %5 = arith.addf %2, %4 : vector<32x128xf32>
    %cst_5 = arith.constant 0.000000e+00 : f32
    %6 = vector.broadcast %cst_5 : f32 to vector<32x128xf32>
    %7 = arith.maximumf %5, %6 : vector<32x128xf32>
    %c0_6 = arith.constant 0 : index
    %c0_7 = arith.constant 0 : index
    %8 = vector.load %arg3[%c0_6, %c0_7] : memref<32x128xf32, #tpu.memory_space<vmem>>, vector<32x128xf32>
    tpu.vector_store %arg3[%c0_6, %c0_7], %7 {strides = array<i32>} : memref<32x128xf32, #tpu.memory_space<vmem>>, vector<32x128xf32>,
    return
  }
}

module attributes {stable_mosaic.version = 11 : i64} {
  func.func @_matmul_bias_act_kernel(%arg0: memref<32x288xbf16, #tpu.memory_space<vmem>>, %arg1: memref<288x128xbf16, #tpu.memory_space<vmem>>, %arg2: memref<32x1xf32, #tpu.memory_space<vmem>>, %arg3: memref<32x128xf32, #tpu.memory_space<vmem>>) attributes {dimension_semantics = [], scalar_prefetch = 0 : i64, scratch_operands = 0 : i64, tpu.core_type = #tpu.core_type<tc>} {
    %c0 = arith.constant 0 : index
    %c0_0 = arith.constant 0 : index
    %0 = vector.load %arg0[%c0, %c0_0] : memref<32x288xbf16, #tpu.memory_space<vmem>>, vector<32x288xbf16>
    %c0_1 = arith.constant 0 : index
    %c0_2 = arith.constant 0 : index
    %1 = vector.load %arg1[%c0_1, %c0_2] : memref<288x128xbf16, #tpu.memory_space<vmem>>, vector<288x128xbf16>
    %cst = arith.constant dense<0.000000e+00> : vector<32x128xf32>
    %2 = tpu.matmul %0, %1, %cst {dimension_numbers = #tpu.dot_dimension_numbers<[1], [0], [0], [1], [0, 0, 1, 1], [], []>} : vector<32x288xbf16>, vector<288x128xbf16>, vector<32x128xf32> -> vector<32x128xf32>
    %c0_3 = arith.constant 0 : index
    %c0_4 = arith.constant 0 : index
    %3 = vector.load %arg2[%c0_3, %c0_4] : memref<32x1xf32, #tpu.memory_space<vmem>>, vector<32x1xf32>
    %4 = vector.broadcast %3 : vector<32x1xf32> to vector<32x128xf32>
    %5 = arith.addf %2, %4 : vector<32x128xf32>
    %cst_5 = arith.constant 0.000000e+00 : f32
    %6 = vector.broadcast %cst_5 : f32 to vector<32x128xf32>
    %7 = arith.maximumf %5, %6 : vector<32x128xf32>
    %c0_6 = arith.constant 0 : index
    %c0_7 = arith.constant 0 : index
    %8 = vector.load %arg3[%c0_6, %c0_7] : memref<32x128xf32, #tpu.memory_space<vmem>>, vector<32x128xf32>
    tpu.vector_store %arg3[%c0_6, %c0_7], %7 {strides = array<i32>} : memref<32x128xf32, #tpu.memory_space<vmem>>, vector<32x128xf32>,
    return
  }
}

module attributes {stable_mosaic.version = 11 : i64} {
  func.func @_matmul_bias_act_kernel(%arg0: memref<64x32xbf16, #tpu.memory_space<vmem>>, %arg1: memref<32x128xbf16, #tpu.memory_space<vmem>>, %arg2: memref<64x1xf32, #tpu.memory_space<vmem>>, %arg3: memref<64x128xf32, #tpu.memory_space<vmem>>) attributes {dimension_semantics = [], scalar_prefetch = 0 : i64, scratch_operands = 0 : i64, tpu.core_type = #tpu.core_type<tc>} {
    %c0 = arith.constant 0 : index
    %c0_0 = arith.constant 0 : index
    %0 = vector.load %arg0[%c0, %c0_0] : memref<64x32xbf16, #tpu.memory_space<vmem>>, vector<64x32xbf16>
    %c0_1 = arith.constant 0 : index
    %c0_2 = arith.constant 0 : index
    %1 = vector.load %arg1[%c0_1, %c0_2] : memref<32x128xbf16, #tpu.memory_space<vmem>>, vector<32x128xbf16>
    %cst = arith.constant dense<0.000000e+00> : vector<64x128xf32>
    %2 = tpu.matmul %0, %1, %cst {dimension_numbers = #tpu.dot_dimension_numbers<[1], [0], [0], [1], [0, 0, 1, 1], [], []>} : vector<64x32xbf16>, vector<32x128xbf16>, vector<64x128xf32> -> vector<64x128xf32>
    %c0_3 = arith.constant 0 : index
    %c0_4 = arith.constant 0 : index
    %3 = vector.load %arg2[%c0_3, %c0_4] : memref<64x1xf32, #tpu.memory_space<vmem>>, vector<64x1xf32>
    %4 = vector.broadcast %3 : vector<64x1xf32> to vector<64x128xf32>
    %5 = arith.addf %2, %4 : vector<64x128xf32>
    %c0_5 = arith.constant 0 : index
    %c0_6 = arith.constant 0 : index
    %6 = vector.load %arg3[%c0_5, %c0_6] : memref<64x128xf32, #tpu.memory_space<vmem>>, vector<64x128xf32>
    tpu.vector_store %arg3[%c0_5, %c0_6], %5 {strides = array<i32>} : memref<64x128xf32, #tpu.memory_space<vmem>>, vector<64x128xf32>,
    return
  }
}

module attributes {stable_mosaic.version = 11 : i64} {
  func.func @_matmul_bias_act_kernel(%arg0: memref<16x288xbf16, #tpu.memory_space<vmem>>, %arg1: memref<288x512xbf16, #tpu.memory_space<vmem>>, %arg2: memref<16x1xf32, #tpu.memory_space<vmem>>, %arg3: memref<16x512xf32, #tpu.memory_space<vmem>>) attributes {dimension_semantics = [], scalar_prefetch = 0 : i64, scratch_operands = 0 : i64, tpu.core_type = #tpu.core_type<tc>} {
    %c0 = arith.constant 0 : index
    %c0_0 = arith.constant 0 : index
    %0 = vector.load %arg0[%c0, %c0_0] : memref<16x288xbf16, #tpu.memory_space<vmem>>, vector<16x288xbf16>
    %c0_1 = arith.constant 0 : index
    %c0_2 = arith.constant 0 : index
    %1 = vector.load %arg1[%c0_1, %c0_2] : memref<288x512xbf16, #tpu.memory_space<vmem>>, vector<288x512xbf16>
    %cst = arith.constant dense<0.000000e+00> : vector<16x512xf32>
    %2 = tpu.matmul %0, %1, %cst {dimension_numbers = #tpu.dot_dimension_numbers<[1], [0], [0], [1], [0, 0, 1, 1], [], []>} : vector<16x288xbf16>, vector<288x512xbf16>, vector<16x512xf32> -> vector<16x512xf32>
    %c0_3 = arith.constant 0 : index
    %c0_4 = arith.constant 0 : index
    %3 = vector.load %arg2[%c0_3, %c0_4] : memref<16x1xf32, #tpu.memory_space<vmem>>, vector<16x1xf32>
    %4 = vector.broadcast %3 : vector<16x1xf32> to vector<16x512xf32>
    %5 = arith.addf %2, %4 : vector<16x512xf32>
    %cst_5 = arith.constant 0.000000e+00 : f32
    %6 = vector.broadcast %cst_5 : f32 to vector<16x512xf32>
    %7 = arith.maximumf %5, %6 : vector<16x512xf32>
    %c0_6 = arith.constant 0 : index
    %c0_7 = arith.constant 0 : index
    %8 = vector.load %arg3[%c0_6, %c0_7] : memref<16x512xf32, #tpu.memory_space<vmem>>, vector<16x512xf32>
    tpu.vector_store %arg3[%c0_6, %c0_7], %7 {strides = array<i32>} : memref<16x512xf32, #tpu.memory_space<vmem>>, vector<16x512xf32>,
    return
  }
}

module attributes {stable_mosaic.version = 11 : i64} {
  func.func @_matmul_bias_act_kernel(%arg0: memref<2x16xbf16, #tpu.memory_space<vmem>>, %arg1: memref<16x512xbf16, #tpu.memory_space<vmem>>, %arg2: memref<2x1xf32, #tpu.memory_space<vmem>>, %arg3: memref<2x512xf32, #tpu.memory_space<vmem>>) attributes {dimension_semantics = [], scalar_prefetch = 0 : i64, scratch_operands = 0 : i64, tpu.core_type = #tpu.core_type<tc>} {
    %c0 = arith.constant 0 : index
    %c0_0 = arith.constant 0 : index
    %0 = vector.load %arg0[%c0, %c0_0] : memref<2x16xbf16, #tpu.memory_space<vmem>>, vector<2x16xbf16>
    %c0_1 = arith.constant 0 : index
    %c0_2 = arith.constant 0 : index
    %1 = vector.load %arg1[%c0_1, %c0_2] : memref<16x512xbf16, #tpu.memory_space<vmem>>, vector<16x512xbf16>
    %cst = arith.constant dense<0.000000e+00> : vector<2x512xf32>
    %2 = tpu.matmul %0, %1, %cst {dimension_numbers = #tpu.dot_dimension_numbers<[1], [0], [0], [1], [0, 0, 1, 1], [], []>} : vector<2x16xbf16>, vector<16x512xbf16>, vector<2x512xf32> -> vector<2x512xf32>
    %c0_3 = arith.constant 0 : index
    %c0_4 = arith.constant 0 : index
    %3 = vector.load %arg2[%c0_3, %c0_4] : memref<2x1xf32, #tpu.memory_space<vmem>>, vector<2x1xf32>
    %4 = vector.broadcast %3 : vector<2x1xf32> to vector<2x512xf32>
    %5 = arith.addf %2, %4 : vector<2x512xf32>
    %c0_5 = arith.constant 0 : index
    %c0_6 = arith.constant 0 : index
    %6 = vector.load %arg3[%c0_5, %c0_6] : memref<2x512xf32, #tpu.memory_space<vmem>>, vector<2x512xf32>
    tpu.vector_store %arg3[%c0_5, %c0_6], %5 {strides = array<i32>} : memref<2x512xf32, #tpu.memory_space<vmem>>, vector<2x512xf32>,
    return
  }
}

module attributes {stable_mosaic.version = 11 : i64} {
  func.func @_matmul_bias_act_kernel(%arg0: memref<16x54xbf16, #tpu.memory_space<vmem>>, %arg1: memref<54x256xbf16, #tpu.memory_space<vmem>>, %arg2: memref<16x1xf32, #tpu.memory_space<vmem>>, %arg3: memref<16x256xf32, #tpu.memory_space<vmem>>) attributes {dimension_semantics = [], scalar_prefetch = 0 : i64, scratch_operands = 0 : i64, tpu.core_type = #tpu.core_type<tc>} {
    %c0 = arith.constant 0 : index
    %c0_0 = arith.constant 0 : index
    %0 = vector.load %arg0[%c0, %c0_0] : memref<16x54xbf16, #tpu.memory_space<vmem>>, vector<16x54xbf16>
    %c0_1 = arith.constant 0 : index
    %c0_2 = arith.constant 0 : index
    %1 = vector.load %arg1[%c0_1, %c0_2] : memref<54x256xbf16, #tpu.memory_space<vmem>>, vector<54x256xbf16>
    %cst = arith.constant dense<0.000000e+00> : vector<16x256xf32>
    %2 = tpu.matmul %0, %1, %cst {dimension_numbers = #tpu.dot_dimension_numbers<[1], [0], [0], [1], [0, 0, 1, 1], [], []>} : vector<16x54xbf16>, vector<54x256xbf16>, vector<16x256xf32> -> vector<16x256xf32>
    %c0_3 = arith.constant 0 : index
    %c0_4 = arith.constant 0 : index
    %3 = vector.load %arg2[%c0_3, %c0_4] : memref<16x1xf32, #tpu.memory_space<vmem>>, vector<16x1xf32>
    %4 = vector.broadcast %3 : vector<16x1xf32> to vector<16x256xf32>
    %5 = arith.addf %2, %4 : vector<16x256xf32>
    %cst_5 = arith.constant 0.000000e+00 : f32
    %6 = vector.broadcast %cst_5 : f32 to vector<16x256xf32>
    %7 = arith.cmpf ogt, %5, %6 : vector<16x256xf32>
    %cst_6 = arith.constant 2.000000e-01 : f32
    %8 = vector.broadcast %cst_6 : f32 to vector<16x256xf32>
    %9 = arith.mulf %8, %5 : vector<16x256xf32>
    %10 = arith.select %7, %5, %9 : vector<16x256xi1>, vector<16x256xf32>
    %c0_7 = arith.constant 0 : index
    %c0_8 = arith.constant 0 : index
    %11 = vector.load %arg3[%c0_7, %c0_8] : memref<16x256xf32, #tpu.memory_space<vmem>>, vector<16x256xf32>
    tpu.vector_store %arg3[%c0_7, %c0_8], %10 {strides = array<i32>} : memref<16x256xf32, #tpu.memory_space<vmem>>, vector<16x256xf32>,
    return
  }
}

module attributes {stable_mosaic.version = 11 : i64} {
  func.func @_matmul_bias_act_kernel(%arg0: memref<32x144xbf16, #tpu.memory_space<vmem>>, %arg1: memref<144x64xbf16, #tpu.memory_space<vmem>>, %arg2: memref<32x1xf32, #tpu.memory_space<vmem>>, %arg3: memref<32x64xf32, #tpu.memory_space<vmem>>) attributes {dimension_semantics = [], scalar_prefetch = 0 : i64, scratch_operands = 0 : i64, tpu.core_type = #tpu.core_type<tc>} {
    %c0 = arith.constant 0 : index
    %c0_0 = arith.constant 0 : index
    %0 = vector.load %arg0[%c0, %c0_0] : memref<32x144xbf16, #tpu.memory_space<vmem>>, vector<32x144xbf16>
    %c0_1 = arith.constant 0 : index
    %c0_2 = arith.constant 0 : index
    %1 = vector.load %arg1[%c0_1, %c0_2] : memref<144x64xbf16, #tpu.memory_space<vmem>>, vector<144x64xbf16>
    %cst = arith.constant dense<0.000000e+00> : vector<32x64xf32>
    %2 = tpu.matmul %0, %1, %cst {dimension_numbers = #tpu.dot_dimension_numbers<[1], [0], [0], [1], [0, 0, 1, 1], [], []>} : vector<32x144xbf16>, vector<144x64xbf16>, vector<32x64xf32> -> vector<32x64xf32>
    %c0_3 = arith.constant 0 : index
    %c0_4 = arith.constant 0 : index
    %3 = vector.load %arg2[%c0_3, %c0_4] : memref<32x1xf32, #tpu.memory_space<vmem>>, vector<32x1xf32>
    %4 = vector.broadcast %3 : vector<32x1xf32> to vector<32x64xf32>
    %5 = arith.addf %2, %4 : vector<32x64xf32>
    %cst_5 = arith.constant 0.000000e+00 : f32
    %6 = vector.broadcast %cst_5 : f32 to vector<32x64xf32>
    %7 = arith.cmpf ogt, %5, %6 : vector<32x64xf32>
    %cst_6 = arith.constant 2.000000e-01 : f32
    %8 = vector.broadcast %cst_6 : f32 to vector<32x64xf32>
    %9 = arith.mulf %8, %5 : vector<32x64xf32>
    %10 = arith.select %7, %5, %9 : vector<32x64xi1>, vector<32x64xf32>
    %c0_7 = arith.constant 0 : index
    %c0_8 = arith.constant 0 : index
    %11 = vector.load %arg3[%c0_7, %c0_8] : memref<32x64xf32, #tpu.memory_space<vmem>>, vector<32x64xf32>
    tpu.vector_store %arg3[%c0_7, %c0_8], %10 {strides = array<i32>} : memref<32x64xf32, #tpu.memory_space<vmem>>, vector<32x64xf32>,
    return
  }
}

module attributes {stable_mosaic.version = 11 : i64} {
  func.func @_matmul_bias_act_kernel(%arg0: memref<1x32xbf16, #tpu.memory_space<vmem>>, %arg1: memref<32x64xbf16, #tpu.memory_space<vmem>>, %arg2: memref<1x1xf32, #tpu.memory_space<vmem>>, %arg3: memref<1x64xf32, #tpu.memory_space<vmem>>) attributes {dimension_semantics = [], scalar_prefetch = 0 : i64, scratch_operands = 0 : i64, tpu.core_type = #tpu.core_type<tc>} {
    %c0 = arith.constant 0 : index
    %c0_0 = arith.constant 0 : index
    %0 = vector.load %arg0[%c0, %c0_0] : memref<1x32xbf16, #tpu.memory_space<vmem>>, vector<1x32xbf16>
    %c0_1 = arith.constant 0 : index
    %c0_2 = arith.constant 0 : index
    %1 = vector.load %arg1[%c0_1, %c0_2] : memref<32x64xbf16, #tpu.memory_space<vmem>>, vector<32x64xbf16>
    %cst = arith.constant dense<0.000000e+00> : vector<1x64xf32>
    %2 = tpu.matmul %0, %1, %cst {dimension_numbers = #tpu.dot_dimension_numbers<[1], [0], [0], [1], [0, 0, 1, 1], [], []>} : vector<1x32xbf16>, vector<32x64xbf16>, vector<1x64xf32> -> vector<1x64xf32>
    %c0_3 = arith.constant 0 : index
    %c0_4 = arith.constant 0 : index
    %3 = vector.load %arg2[%c0_3, %c0_4] : memref<1x1xf32, #tpu.memory_space<vmem>>, vector<1x1xf32>
    %4 = vector.broadcast %3 : vector<1x1xf32> to vector<1x64xf32>
    %5 = arith.addf %2, %4 : vector<1x64xf32>
    %6 = arith.negf %5 : vector<1x64xf32>
    %7 = math.exp %6 : vector<1x64xf32>
    %cst_5 = arith.constant 1.000000e+00 : f32
    %8 = vector.broadcast %cst_5 : f32 to vector<1x64xf32>
    %9 = arith.addf %8, %7 : vector<1x64xf32>
    %10 = arith.divf %8, %9 : vector<1x64xf32>
    %c0_6 = arith.constant 0 : index
    %c0_7 = arith.constant 0 : index
    %11 = vector.load %arg3[%c0_6, %c0_7] : memref<1x64xf32, #tpu.memory_space<vmem>>, vector<1x64xf32>
    tpu.vector_store %arg3[%c0_6, %c0_7], %10 {strides = array<i32>} : memref<1x64xf32, #tpu.memory_space<vmem>>, vector<1x64xf32>,
    return
  }
}

</mosaic_0001>

<llo_original>
// kernel: cgan_forward.11
$region0: #{cgan_forward.11}
  #allocation0 [shape = 'u32[]', space=smem, size = 0x4, offset = 0x4, fixed_abs, tag = 'smem constant byte address 0x4 - core index']
  #allocation1 [shape = 'u32[144,128]{1,0:T(1,128)}', space=vmem, size = 0x12000, scoped, tag = 'internal scratch']
  %s0 = inlined_call_operand.vmem [shape: bf16[16,36], index: 0, kind: input, shape index: {}]
  %s1 = inlined_call_operand.vmem [shape: bf16[36,512], index: 1, kind: input, shape index: {}]
  %s2 = inlined_call_operand.vmem [shape: f32[16,1], index: 2, kind: input, shape index: {}]
  %s3 = inlined_call_operand.vmem [shape: f32[16,512], index: 3, kind: output, shape index: {}]
  %s4 = sld [smem:[#allocation0]]
  $region22: #{cgan_forward.11} parent=0
    _
  %s6 = ssub.s32 1, %s4
  %s7 = scalar_select 0, %s6, %s4
  // Predicated region
  $region2: #{cgan_forward.11} parent=0 // pred_check
    _
  $region3: #{cgan_forward.11} parent=0 // pred_check_branch
    %9 = sbr.rel (0) target = $region5
  $region4: #{cgan_forward.11} parent=0 // pred_region
    _
  $region5: #{cgan_forward.11} parent=0 // pred_fallthru
    _
  // Predicated region
  $region6: #{cgan_forward.11} parent=0 // pred_check
    _
  $region7: #{cgan_forward.11} parent=0 // pred_check_branch
    %11 = sbr.rel (0) target = $region9
  $region8: #{cgan_forward.11} parent=0 // pred_region
    _
  $region9: #{cgan_forward.11} parent=0 // pred_fallthru
    _
  // Predicated region
  $region10: #{cgan_forward.11} parent=0 // pred_check
    _
  $region11: #{cgan_forward.11} parent=0 // pred_check_branch
    %13 = sbr.rel (0) target = $region13
  $region12: #{cgan_forward.11} parent=0 // pred_region
    _
  $region13: #{cgan_forward.11} parent=0 // pred_fallthru
    _
  %v15 = vld [vmem:[%s0] sm:$0xf]
  %v16 = vld [vmem:[%s0 + $0x4] sm:$0xf]
  %v17 = vld [vmem:[%s1] sm:$0xff]
  %v18 = vld [vmem:[%s1 + $0x8] sm:$0xff]
  %v19 = vld [vmem:[%s1 + $0x10] sm:$0xff]
  %v20 = vld [vmem:[%s1 + $0x18] sm:$0xff]
  %v21 = vld [vmem:[%s1 + $0x20] sm:$0xff]
  %v22 = vld [vmem:[%s1 + $0x28] sm:$0xff]
  %v23 = vld [vmem:[%s1 + $0x30] sm:$0xff]
  %v24 = vld [vmem:[%s1 + $0x38] sm:$0xff]
  %v25 = vld [vmem:[%s1 + $0x40] sm:$0x33]
  %v26 = vld [vmem:[%s1 + $0x48] sm:$0x33]
  %v27 = vld [vmem:[%s2] sm:$0xff]
  %v28 = vld [vmem:[%s2 + $0x8] sm:$0xff]
  %30 = vset.pattern.permute.xlu0 0
  %31 = vperm.xlu0 %30, %v27
  %v32 = vpop.permute.xlu0 %31
  %35 = vset.pattern.permute.xlu0 0
  %36 = vperm.xlu0 %35, %v28
  %v37 = vpop.permute.xlu0 %36
  %v41 = vunpack.c.l.b16 %v15
  %v42 = vunpack.c.l.b16 %v16
  %v43 = vpack.c.b16 %v42, %v41
  %v54 = vunpack.c.l.b16 %v17
  %v55 = vunpack.c.h.b16 %v17
  %v56 = vunpack.c.l.b16 %v18
  %v57 = vunpack.c.h.b16 %v18
  %v58 = vunpack.c.l.b16 %v19
  %v59 = vunpack.c.h.b16 %v19
  %v60 = vunpack.c.l.b16 %v20
  %v61 = vunpack.c.h.b16 %v20
  %v62 = vunpack.c.l.b16 %v21
  %v63 = vunpack.c.h.b16 %v21
  %v64 = vunpack.c.l.b16 %v22
  %v65 = vunpack.c.h.b16 %v22
  %v66 = vunpack.c.l.b16 %v23
  %v67 = vunpack.c.h.b16 %v23
  %v68 = vunpack.c.l.b16 %v24
  %v69 = vunpack.c.h.b16 %v24
  %v70 = vunpack.c.l.b16 %v25
  %v71 = vunpack.c.h.b16 %v25
  %v72 = vunpack.c.l.b16 %v26
  %v73 = vunpack.c.h.b16 %v26
  %v74 = vpack.c.b16 %v58, %v54
  %v75 = vpack.c.b16 %v59, %v55
  %v76 = vpack.c.b16 %v60, %v56
  %v77 = vpack.c.b16 %v61, %v57
  %v78 = vpack.c.b16 %v66, %v62
  %v79 = vpack.c.b16 %v67, %v63
  %v80 = vpack.c.b16 %v68, %v64
  %v81 = vpack.c.b16 %v69, %v65
  %v82 = vpack.c.b16 %v70, %v70
  %v83 = vpack.c.b16 %v71, %v71
  %v84 = vpack.c.b16 %v72, %v72
  %v85 = vpack.c.b16 %v73, %v73
  %vm94 = vcmask 293888
  %v96 = vsel %vm94, %v43, 0
  %vm98 = vcmask 1041408
  %v100 = vsel %vm98, %v82, 0
  %v103 = vsel %vm98, %v83, 0
  %v106 = vsel %vm98, %v84, 0
  %v109 = vsel %vm98, %v85, 0
  %111 = vmatprep.subr.bf16.mxu0 0
  %112 = vmatpush1.bf16.msra.mxu0 0
  %113 = vmatprep.subr.bf16.mxu0 0
  %114 = vmatpush1.bf16.msra.mxu0 0
  %115 = vmatprep.subr.bf16.mxu0 0
  %116 = vmatpush1.bf16.msra.mxu0 0
  %117 = vmatprep.subr.bf16.mxu0 0
  %118 = vmatpush1.bf16.msra.mxu0 0
  %119 = vmatprep.subr.bf16.mxu0 0
  %120 = vmatpush1.bf16.msra.mxu0 0
  %121 = vmatprep.subr.bf16.mxu0 %v103
  %122 = vmatpush1.bf16.msra.mxu0 %v100
  %123 = vmatprep.subr.bf16.mxu0 %v79
  %124 = vmatpush1.bf16.msra.mxu0 %v78
  %125 = vmatprep.subr.bf16.mxu0 %v75
  %126 = vmatpush1.bf16.msra.mxu0 %v74
  %127 = vmatprep.subr.bf16.mxu0 0
  %128 = vmatpush2.bf16.msra.mxu0 0
  %129 = vmatprep.subr.bf16.mxu0 0
  %130 = vmatpush2.bf16.msra.mxu0 0
  %131 = vmatprep.subr.bf16.mxu0 0
  %132 = vmatpush2.bf16.msra.mxu0 0
  %133 = vmatprep.subr.bf16.mxu0 0
  %134 = vmatpush2.bf16.msra.mxu0 0
  %135 = vmatprep.subr.bf16.mxu0 0
  %136 = vmatpush2.bf16.msra.mxu0 0
  %137 = vmatprep.subr.bf16.mxu0 0
  %138 = vmatpush2.bf16.msra.mxu0 0
  %139 = vmatprep.subr.bf16.mxu0 0
  %140 = vmatpush2.bf16.msra.mxu0 0
  %141 = vmatprep.subr.bf16.mxu0 0
  %142 = vmatpush2.bf16.msra.mxu0 0
  %143 = vmatprep.mubr.bf16.mxu0 0
  %144 = vmatmul.mubr.bf16.gmra.mxu0 %v96
  %v145 = vpop.f32.mrf.mxu0
  %v146 = vadd.f32 %v32, %v145
  %v147 = vpop.f32.mrf.mxu0
  %v148 = vadd.f32 %v32, %v147
  %v149 = vpop.f32.mrf.mxu0
  %v150 = vadd.f32 %v37, %v149
  %v151 = vpop.f32.mrf.mxu0
  %v152 = vadd.f32 %v37, %v151
  %153 = vdwg.mxu0
  %154 = vmatprep.subr.bf16.mxu0 0
  %155 = vmatpush1.bf16.msra.mxu0 0
  %156 = vmatprep.subr.bf16.mxu0 0
  %157 = vmatpush1.bf16.msra.mxu0 0
  %158 = vmatprep.subr.bf16.mxu0 0
  %159 = vmatpush1.bf16.msra.mxu0 0
  %160 = vmatprep.subr.bf16.mxu0 0
  %161 = vmatpush1.bf16.msra.mxu0 0
  %162 = vmatprep.subr.bf16.mxu0 0
  %163 = vmatpush1.bf16.msra.mxu0 0
  %164 = vmatprep.subr.bf16.mxu0 %v109
  %165 = vmatpush1.bf16.msra.mxu0 %v106
  %166 = vmatprep.subr.bf16.mxu0 %v81
  %167 = vmatpush1.bf16.msra.mxu0 %v80
  %168 = vmatprep.subr.bf16.mxu0 %v77
  %169 = vmatpush1.bf16.msra.mxu0 %v76
  %170 = vmatprep.subr.bf16.mxu0 0
  %171 = vmatpush2.bf16.msra.mxu0 0
  %172 = vmatprep.subr.bf16.mxu0 0
  %173 = vmatpush2.bf16.msra.mxu0 0
  %174 = vmatprep.subr.bf16.mxu0 0
  %175 = vmatpush2.bf16.msra.mxu0 0
  %176 = vmatprep.subr.bf16.mxu0 0
  %177 = vmatpush2.bf16.msra.mxu0 0
  %178 = vmatprep.subr.bf16.mxu0 0
  %179 = vmatpush2.bf16.msra.mxu0 0
  %180 = vmatprep.subr.bf16.mxu0 0
  %181 = vmatpush2.bf16.msra.mxu0 0
  %182 = vmatprep.subr.bf16.mxu0 0
  %183 = vmatpush2.bf16.msra.mxu0 0
  %184 = vmatprep.subr.bf16.mxu0 0
  %185 = vmatpush2.bf16.msra.mxu0 0
  %186 = vmatprep.mubr.bf16.mxu0 0
  %187 = vmatmul.mubr.bf16.gmra.mxu0 %v96
  %v188 = vpop.f32.mrf.mxu0
  %v189 = vadd.f32 %v32, %v188
  %v190 = vpop.f32.mrf.mxu0
  %v191 = vadd.f32 %v32, %v190
  %v192 = vpop.f32.mrf.mxu0
  %v193 = vadd.f32 %v37, %v192
  %v194 = vpop.f32.mrf.mxu0
  %v195 = vadd.f32 %v37, %v194
  %196 = vdwg.mxu0
  %v197 = vmax.f32 %v146, 0.0
  %v198 = vmax.f32 %v148, 0.0
  %v199 = vmax.f32 %v189, 0.0
  %v200 = vmax.f32 %v191, 0.0
  %v201 = vmax.f32 %v150, 0.0
  %v202 = vmax.f32 %v152, 0.0
  %v203 = vmax.f32 %v193, 0.0
  %v204 = vmax.f32 %v195, 0.0
  %205 = vst [vmem:[%s3] sm:$0xff] %v197
  %206 = vst [vmem:[%s3 + $0x8] sm:$0xff] %v198
  %207 = vst [vmem:[%s3 + $0x10] sm:$0xff] %v199
  %208 = vst [vmem:[%s3 + $0x18] sm:$0xff] %v200
  %209 = vst [vmem:[%s3 + $0x20] sm:$0xff] %v201
  %210 = vst [vmem:[%s3 + $0x28] sm:$0xff] %v202
  %211 = vst [vmem:[%s3 + $0x30] sm:$0xff] %v203
  %212 = vst [vmem:[%s3 + $0x38] sm:$0xff] %v204
  // Predicated region
  $region14: #{cgan_forward.11} parent=0 // pred_check
    _
  $region15: #{cgan_forward.11} parent=0 // pred_check_branch
    %214 = sbr.rel (0) target = $region17
  $region16: #{cgan_forward.11} parent=0 // pred_region
    _
  $region17: #{cgan_forward.11} parent=0 // pred_fallthru
    _
  // Predicated region
  $region18: #{cgan_forward.11} parent=0 // pred_check
    _
  $region19: #{cgan_forward.11} parent=0 // pred_check_branch
    %216 = sbr.rel (0) target = $region21
  $region20: #{cgan_forward.11} parent=0 // pred_region
    _
  $region21: #{cgan_forward.11} parent=0 // pred_fallthru
    _

// kernel: cgan_forward.12
$region0: #{cgan_forward.12}
  #allocation0 [shape = 'u32[]', space=smem, size = 0x4, offset = 0x4, fixed_abs, tag = 'smem constant byte address 0x4 - core index']
  #allocation1 [shape = 'u32[144,128]{1,0:T(1,128)}', space=vmem, size = 0x12000, scoped, tag = 'internal scratch']
  %s0 = inlined_call_operand.vmem [shape: bf16[16,144], index: 0, kind: input, shape index: {}]
  %s1 = inlined_call_operand.vmem [shape: bf16[144,512], index: 1, kind: input, shape index: {}]
  %s2 = inlined_call_operand.vmem [shape: f32[16,1], index: 2, kind: input, shape index: {}]
  %s3 = inlined_call_operand.vmem [shape: f32[16,512], index: 3, kind: output, shape index: {}]
  %s4 = sld [smem:[#allocation0]]
  $region22: #{cgan_forward.12} parent=0
    _
  %s6 = ssub.s32 1, %s4
  %s7 = scalar_select 0, %s6, %s4
  // Predicated region
  $region2: #{cgan_forward.12} parent=0 // pred_check
    _
  $region3: #{cgan_forward.12} parent=0 // pred_check_branch
    %9 = sbr.rel (0) target = $region5
  $region4: #{cgan_forward.12} parent=0 // pred_region
    _
  $region5: #{cgan_forward.12} parent=0 // pred_fallthru
    _
  // Predicated region
  $region6: #{cgan_forward.12} parent=0 // pred_check
    _
  $region7: #{cgan_forward.12} parent=0 // pred_check_branch
    %11 = sbr.rel (0) target = $region9
  $region8: #{cgan_forward.12} parent=0 // pred_region
    _
  $region9: #{cgan_forward.12} parent=0 // pred_fallthru
    _
  // Predicated region
  $region10: #{cgan_forward.12} parent=0 // pred_check
    _
  $region11: #{cgan_forward.12} parent=0 // pred_check_branch
    %13 = sbr.rel (0) target = $region13
  $region12: #{cgan_forward.12} parent=0 // pred_region
    _
  $region13: #{cgan_forward.12} parent=0 // pred_fallthru
    _
  %v15 = vld [vmem:[%s0] sm:$0xff]
  %v16 = vld [vmem:[%s0 + $0x8] sm:$0xff]
  %v17 = vld [vmem:[%s1] sm:$0xff]
  %v18 = vld [vmem:[%s1 + $0x8] sm:$0xff]
  %v19 = vld [vmem:[%s1 + $0x10] sm:$0xff]
  %v20 = vld [vmem:[%s1 + $0x18] sm:$0xff]
  %v21 = vld [vmem:[%s1 + $0x20] sm:$0xff]
  %v22 = vld [vmem:[%s1 + $0x28] sm:$0xff]
  %v23 = vld [vmem:[%s1 + $0x30] sm:$0xff]
  %v24 = vld [vmem:[%s1 + $0x38] sm:$0xff]
  %v25 = vld [vmem:[%s1 + $0x40] sm:$0xff]
  %v26 = vld [vmem:[%s1 + $0x48] sm:$0xff]
  %v27 = vld [vmem:[%s1 + $0x50] sm:$0xff]
  %v28 = vld [vmem:[%s1 + $0x58] sm:$0xff]
  %v29 = vld [vmem:[%s1 + $0x60] sm:$0xff]
  %v30 = vld [vmem:[%s1 + $0x68] sm:$0xff]
  %v31 = vld [vmem:[%s1 + $0x70] sm:$0xff]
  %v32 = vld [vmem:[%s1 + $0x78] sm:$0xff]
  %v33 = vld [vmem:[%s1 + $0x80] sm:$0xff]
  %v34 = vld [vmem:[%s1 + $0x88] sm:$0xff]
  %v35 = vld [vmem:[%s1 + $0x90] sm:$0xff]
  %v36 = vld [vmem:[%s1 + $0x98] sm:$0xff]
  %v37 = vld [vmem:[%s1 + $0xa0] sm:$0xff]
  %v38 = vld [vmem:[%s1 + $0xa8] sm:$0xff]
  %v39 = vld [vmem:[%s1 + $0xb0] sm:$0xff]
  %v40 = vld [vmem:[%s1 + $0xb8] sm:$0xff]
  %v41 = vld [vmem:[%s1 + $0xc0] sm:$0xff]
  %v42 = vld [vmem:[%s1 + $0xc8] sm:$0xff]
  %v43 = vld [vmem:[%s1 + $0xd0] sm:$0xff]
  %v44 = vld [vmem:[%s1 + $0xd8] sm:$0xff]
  %v45 = vld [vmem:[%s1 + $0xe0] sm:$0xff]
  %v46 = vld [vmem:[%s1 + $0xe8] sm:$0xff]
  %v47 = vld [vmem:[%s1 + $0xf0] sm:$0xff]
  %v48 = vld [vmem:[%s1 + $0xf8] sm:$0xff]
  %v49 = vld [vmem:[%s1 + $0x100] sm:$0xff]
  %v50 = vld [vmem:[%s1 + $0x108] sm:$0xff]
  %v51 = vld [vmem:[%s1 + $0x110] sm:$0xff]
  %v52 = vld [vmem:[%s1 + $0x118] sm:$0xff]
  %v53 = vld [vmem:[%s2] sm:$0xff]
  %v54 = vld [vmem:[%s2 + $0x8] sm:$0xff]
  %56 = vset.pattern.permute.xlu0 0
  %57 = vperm.xlu0 %56, %v53
  %v58 = vpop.permute.xlu0 %57
  %61 = vset.pattern.permute.xlu0 0
  %62 = vperm.xlu0 %61, %v54
  %v63 = vpop.permute.xlu0 %62
  %v67 = vunpack.c.l.b16 %v15
  %v68 = vunpack.c.h.b16 %v15
  %v69 = vunpack.c.l.b16 %v16
  %v70 = vunpack.c.h.b16 %v16
  %v71 = vpack.c.b16 %v69, %v67
  %v72 = vpack.c.b16 %v70, %v68
  %v110 = vunpack.c.l.b16 %v17
  %v111 = vunpack.c.h.b16 %v17
  %v112 = vunpack.c.l.b16 %v18
  %v113 = vunpack.c.h.b16 %v18
  %v114 = vunpack.c.l.b16 %v19
  %v115 = vunpack.c.h.b16 %v19
  %v116 = vunpack.c.l.b16 %v20
  %v117 = vunpack.c.h.b16 %v20
  %v118 = vunpack.c.l.b16 %v21
  %v119 = vunpack.c.h.b16 %v21
  %v120 = vunpack.c.l.b16 %v22
  %v121 = vunpack.c.h.b16 %v22
  %v122 = vunpack.c.l.b16 %v23
  %v123 = vunpack.c.h.b16 %v23
  %v124 = vunpack.c.l.b16 %v24
  %v125 = vunpack.c.h.b16 %v24
  %v126 = vunpack.c.l.b16 %v25
  %v127 = vunpack.c.h.b16 %v25
  %v128 = vunpack.c.l.b16 %v26
  %v129 = vunpack.c.h.b16 %v26
  %v130 = vunpack.c.l.b16 %v27
  %v131 = vunpack.c.h.b16 %v27
  %v132 = vunpack.c.l.b16 %v28
  %v133 = vunpack.c.h.b16 %v28
  %v134 = vunpack.c.l.b16 %v29
  %v135 = vunpack.c.h.b16 %v29
  %v136 = vunpack.c.l.b16 %v30
  %v137 = vunpack.c.h.b16 %v30
  %v138 = vunpack.c.l.b16 %v31
  %v139 = vunpack.c.h.b16 %v31
  %v140 = vunpack.c.l.b16 %v32
  %v141 = vunpack.c.h.b16 %v32
  %v142 = vunpack.c.l.b16 %v33
  %v143 = vunpack.c.h.b16 %v33
  %v144 = vunpack.c.l.b16 %v34
  %v145 = vunpack.c.h.b16 %v34
  %v146 = vunpack.c.l.b16 %v35
  %v147 = vunpack.c.h.b16 %v35
  %v148 = vunpack.c.l.b16 %v36
  %v149 = vunpack.c.h.b16 %v36
  %v150 = vunpack.c.l.b16 %v37
  %v151 = vunpack.c.h.b16 %v37
  %v152 = vunpack.c.l.b16 %v38
  %v153 = vunpack.c.h.b16 %v38
  %v154 = vunpack.c.l.b16 %v39
  %v155 = vunpack.c.h.b16 %v39
  %v156 = vunpack.c.l.b16 %v40
  %v157 = vunpack.c.h.b16 %v40
  %v158 = vunpack.c.l.b16 %v41
  %v159 = vunpack.c.h.b16 %v41
  %v160 = vunpack.c.l.b16 %v42
  %v161 = vunpack.c.h.b16 %v42
  %v162 = vunpack.c.l.b16 %v43
  %v163 = vunpack.c.h.b16 %v43
  %v164 = vunpack.c.l.b16 %v44
  %v165 = vunpack.c.h.b16 %v44
  %v166 = vunpack.c.l.b16 %v45
  %v167 = vunpack.c.h.b16 %v45
  %v168 = vunpack.c.l.b16 %v46
  %v169 = vunpack.c.h.b16 %v46
  %v170 = vunpack.c.l.b16 %v47
  %v171 = vunpack.c.h.b16 %v47
  %v172 = vunpack.c.l.b16 %v48
  %v173 = vunpack.c.h.b16 %v48
  %v174 = vunpack.c.l.b16 %v49
  %v175 = vunpack.c.h.b16 %v49
  %v176 = vunpack.c.l.b16 %v50
  %v177 = vunpack.c.h.b16 %v50
  %v178 = vunpack.c.l.b16 %v51
  %v179 = vunpack.c.h.b16 %v51
  %v180 = vunpack.c.l.b16 %v52
  %v181 = vunpack.c.h.b16 %v52
  %v182 = vpack.c.b16 %v114, %v110
  %v183 = vpack.c.b16 %v115, %v111
  %v184 = vpack.c.b16 %v116, %v112
  %v185 = vpack.c.b16 %v117, %v113
  %v186 = vpack.c.b16 %v122, %v118
  %v187 = vpack.c.b16 %v123, %v119
  %v188 = vpack.c.b16 %v124, %v120
  %v189 = vpack.c.b16 %v125, %v121
  %v190 = vpack.c.b16 %v130, %v126
  %v191 = vpack.c.b16 %v131, %v127
  %v192 = vpack.c.b16 %v132, %v128
  %v193 = vpack.c.b16 %v133, %v129
  %v194 = vpack.c.b16 %v138, %v134
  %v195 = vpack.c.b16 %v139, %v135
  %v196 = vpack.c.b16 %v140, %v136
  %v197 = vpack.c.b16 %v141, %v137
  %v198 = vpack.c.b16 %v146, %v142
  %v199 = vpack.c.b16 %v147, %v143
  %v200 = vpack.c.b16 %v148, %v144
  %v201 = vpack.c.b16 %v149, %v145
  %v202 = vpack.c.b16 %v154, %v150
  %v203 = vpack.c.b16 %v155, %v151
  %v204 = vpack.c.b16 %v156, %v152
  %v205 = vpack.c.b16 %v157, %v153
  %v206 = vpack.c.b16 %v162, %v158
  %v207 = vpack.c.b16 %v163, %v159
  %v208 = vpack.c.b16 %v164, %v160
  %v209 = vpack.c.b16 %v165, %v161
  %v210 = vpack.c.b16 %v170, %v166
  %v211 = vpack.c.b16 %v171, %v167
  %v212 = vpack.c.b16 %v172, %v168
  %v213 = vpack.c.b16 %v173, %v169
  %v214 = vpack.c.b16 %v178, %v174
  %v215 = vpack.c.b16 %v179, %v175
  %v216 = vpack.c.b16 %v180, %v176
  %v217 = vpack.c.b16 %v181, %v177
  %vm254 = vcmask 130048
  %v256 = vsel %vm254, %v72, 0
  %258 = vmatprep.subr.bf16.mxu0 %v211
  %259 = vmatpush1.bf16.msra.mxu0 %v210
  %260 = vmatprep.subr.bf16.mxu0 %v207
  %261 = vmatpush1.bf16.msra.mxu0 %v206
  %262 = vmatprep.subr.bf16.mxu0 %v203
  %263 = vmatpush1.bf16.msra.mxu0 %v202
  %264 = vmatprep.subr.bf16.mxu0 %v199
  %265 = vmatpush1.bf16.msra.mxu0 %v198
  %266 = vmatprep.subr.bf16.mxu0 %v195
  %267 = vmatpush1.bf16.msra.mxu0 %v194
  %268 = vmatprep.subr.bf16.mxu0 %v191
  %269 = vmatpush1.bf16.msra.mxu0 %v190
  %270 = vmatprep.subr.bf16.mxu0 %v187
  %271 = vmatpush1.bf16.msra.mxu0 %v186
  %272 = vmatprep.subr.bf16.mxu0 %v183
  %273 = vmatpush1.bf16.msra.mxu0 %v182
  %274 = vmatprep.subr.bf16.mxu0 0
  %275 = vmatpush2.bf16.msra.mxu0 0
  %276 = vmatprep.subr.bf16.mxu0 0
  %277 = vmatpush2.bf16.msra.mxu0 0
  %278 = vmatprep.subr.bf16.mxu0 0
  %279 = vmatpush2.bf16.msra.mxu0 0
  %280 = vmatprep.subr.bf16.mxu0 0
  %281 = vmatpush2.bf16.msra.mxu0 0
  %282 = vmatprep.subr.bf16.mxu0 0
  %283 = vmatpush2.bf16.msra.mxu0 0
  %284 = vmatprep.subr.bf16.mxu0 0
  %285 = vmatpush2.bf16.msra.mxu0 0
  %286 = vmatprep.subr.bf16.mxu0 0
  %287 = vmatpush2.bf16.msra.mxu0 0
  %288 = vmatprep.subr.bf16.mxu0 %v215
  %289 = vmatpush2.bf16.msra.mxu0 %v214
  %290 = vmatprep.mubr.bf16.mxu0 %v256
  %291 = vmatmul.mubr.bf16.gmra.mxu0 %v71
  %v292 = vpop.f32.mrf.mxu0
  %v293 = vadd.f32 %v58, %v292
  %v294 = vpop.f32.mrf.mxu0
  %v295 = vadd.f32 %v58, %v294
  %v296 = vpop.f32.mrf.mxu0
  %v297 = vadd.f32 %v63, %v296
  %v298 = vpop.f32.mrf.mxu0
  %v299 = vadd.f32 %v63, %v298
  %300 = vdwg.mxu0
  %301 = vmatprep.subr.bf16.mxu0 %v213
  %302 = vmatpush1.bf16.msra.mxu0 %v212
  %303 = vmatprep.subr.bf16.mxu0 %v209
  %304 = vmatpush1.bf16.msra.mxu0 %v208
  %305 = vmatprep.subr.bf16.mxu0 %v205
  %306 = vmatpush1.bf16.msra.mxu0 %v204
  %307 = vmatprep.subr.bf16.mxu0 %v201
  %308 = vmatpush1.bf16.msra.mxu0 %v200
  %309 = vmatprep.subr.bf16.mxu0 %v197
  %310 = vmatpush1.bf16.msra.mxu0 %v196
  %311 = vmatprep.subr.bf16.mxu0 %v193
  %312 = vmatpush1.bf16.msra.mxu0 %v192
  %313 = vmatprep.subr.bf16.mxu0 %v189
  %314 = vmatpush1.bf16.msra.mxu0 %v188
  %315 = vmatprep.subr.bf16.mxu0 %v185
  %316 = vmatpush1.bf16.msra.mxu0 %v184
  %317 = vmatprep.subr.bf16.mxu0 0
  %318 = vmatpush2.bf16.msra.mxu0 0
  %319 = vmatprep.subr.bf16.mxu0 0
  %320 = vmatpush2.bf16.msra.mxu0 0
  %321 = vmatprep.subr.bf16.mxu0 0
  %322 = vmatpush2.bf16.msra.mxu0 0
  %323 = vmatprep.subr.bf16.mxu0 0
  %324 = vmatpush2.bf16.msra.mxu0 0
  %325 = vmatprep.subr.bf16.mxu0 0
  %326 = vmatpush2.bf16.msra.mxu0 0
  %327 = vmatprep.subr.bf16.mxu0 0
  %328 = vmatpush2.bf16.msra.mxu0 0
  %329 = vmatprep.subr.bf16.mxu0 0
  %330 = vmatpush2.bf16.msra.mxu0 0
  %331 = vmatprep.subr.bf16.mxu0 %v217
  %332 = vmatpush2.bf16.msra.mxu0 %v216
  %333 = vmatprep.mubr.bf16.mxu0 %v256
  %334 = vmatmul.mubr.bf16.gmra.mxu0 %v71
  %v335 = vpop.f32.mrf.mxu0
  %v336 = vadd.f32 %v58, %v335
  %v337 = vpop.f32.mrf.mxu0
  %v338 = vadd.f32 %v58, %v337
  %v339 = vpop.f32.mrf.mxu0
  %v340 = vadd.f32 %v63, %v339
  %v341 = vpop.f32.mrf.mxu0
  %v342 = vadd.f32 %v63, %v341
  %343 = vdwg.mxu0
  %v344 = vmax.f32 %v293, 0.0
  %v345 = vmax.f32 %v295, 0.0
  %v346 = vmax.f32 %v336, 0.0
  %v347 = vmax.f32 %v338, 0.0
  %v348 = vmax.f32 %v297, 0.0
  %v349 = vmax.f32 %v299, 0.0
  %v350 = vmax.f32 %v340, 0.0
  %v351 = vmax.f32 %v342, 0.0
  %352 = vst [vmem:[%s3] sm:$0xff] %v344
  %353 = vst [vmem:[%s3 + $0x8] sm:$0xff] %v345
  %354 = vst [vmem:[%s3 + $0x10] sm:$0xff] %v346
  %355 = vst [vmem:[%s3 + $0x18] sm:$0xff] %v347
  %356 = vst [vmem:[%s3 + $0x20] sm:$0xff] %v348
  %357 = vst [vmem:[%s3 + $0x28] sm:$0xff] %v349
  %358 = vst [vmem:[%s3 + $0x30] sm:$0xff] %v350
  %359 = vst [vmem:[%s3 + $0x38] sm:$0xff] %v351
  // Predicated region
  $region14: #{cgan_forward.12} parent=0 // pred_check
    _
  $region15: #{cgan_forward.12} parent=0 // pred_check_branch
    %361 = sbr.rel (0) target = $region17
  $region16: #{cgan_forward.12} parent=0 // pred_region
    _
  $region17: #{cgan_forward.12} parent=0 // pred_fallthru
    _
  // Predicated region
  $region18: #{cgan_forward.12} parent=0 // pred_check
    _
  $region19: #{cgan_forward.12} parent=0 // pred_check_branch
    %363 = sbr.rel (0) target = $region21
  $region20: #{cgan_forward.12} parent=0 // pred_region
    _
  $region21: #{cgan_forward.12} parent=0 // pred_fallthru
    _

// kernel: cgan_forward.13
$region0: #{cgan_forward.13}
  #allocation0 [shape = 'u32[]', space=smem, size = 0x4, offset = 0x4, fixed_abs, tag = 'smem constant byte address 0x4 - core index']
  #allocation1 [shape = 'u32[144,128]{1,0:T(1,128)}', space=vmem, size = 0x12000, scoped, tag = 'internal scratch']
  %s0 = inlined_call_operand.vmem [shape: bf16[32,144], index: 0, kind: input, shape index: {}]
  %s1 = inlined_call_operand.vmem [shape: bf16[144,128], index: 1, kind: input, shape index: {}]
  %s2 = inlined_call_operand.vmem [shape: f32[32,1], index: 2, kind: input, shape index: {}]
  %s3 = inlined_call_operand.vmem [shape: f32[32,128], index: 3, kind: output, shape index: {}]
  %s4 = sld [smem:[#allocation0]]
  $region22: #{cgan_forward.13} parent=0
    _
  %s6 = ssub.s32 1, %s4
  %s7 = scalar_select 0, %s6, %s4
  // Predicated region
  $region2: #{cgan_forward.13} parent=0 // pred_check
    _
  $region3: #{cgan_forward.13} parent=0 // pred_check_branch
    %9 = sbr.rel (0) target = $region5
  $region4: #{cgan_forward.13} parent=0 // pred_region
    _
  $region5: #{cgan_forward.13} parent=0 // pred_fallthru
    _
  // Predicated region
  $region6: #{cgan_forward.13} parent=0 // pred_check
    _
  $region7: #{cgan_forward.13} parent=0 // pred_check_branch
    %11 = sbr.rel (0) target = $region9
  $region8: #{cgan_forward.13} parent=0 // pred_region
    _
  $region9: #{cgan_forward.13} parent=0 // pred_fallthru
    _
  // Predicated region
  $region10: #{cgan_forward.13} parent=0 // pred_check
    _
  $region11: #{cgan_forward.13} parent=0 // pred_check_branch
    %13 = sbr.rel (0) target = $region13
  $region12: #{cgan_forward.13} parent=0 // pred_region
    _
  $region13: #{cgan_forward.13} parent=0 // pred_fallthru
    _
  %v15 = vld [vmem:[%s0] sm:$0xff]
  %v16 = vld [vmem:[%s0 + $0x8] sm:$0xff]
  %v17 = vld [vmem:[%s0 + $0x10] sm:$0xff]
  %v18 = vld [vmem:[%s0 + $0x18] sm:$0xff]
  %v19 = vld [vmem:[%s1] sm:$0xf]
  %v20 = vld [vmem:[%s1 + $0x4] sm:$0xf]
  %v21 = vld [vmem:[%s1 + $0x8] sm:$0xf]
  %v22 = vld [vmem:[%s1 + $0xc] sm:$0xf]
  %v23 = vld [vmem:[%s1 + $0x10] sm:$0xf]
  %v24 = vld [vmem:[%s1 + $0x14] sm:$0xf]
  %v25 = vld [vmem:[%s1 + $0x18] sm:$0xf]
  %v26 = vld [vmem:[%s1 + $0x1c] sm:$0xf]
  %v27 = vld [vmem:[%s1 + $0x20] sm:$0xf]
  %v28 = vld [vmem:[%s1 + $0x24] sm:$0xf]
  %v29 = vld [vmem:[%s1 + $0x28] sm:$0xf]
  %v30 = vld [vmem:[%s1 + $0x2c] sm:$0xf]
  %v31 = vld [vmem:[%s1 + $0x30] sm:$0xf]
  %v32 = vld [vmem:[%s1 + $0x34] sm:$0xf]
  %v33 = vld [vmem:[%s1 + $0x38] sm:$0xf]
  %v34 = vld [vmem:[%s1 + $0x3c] sm:$0xf]
  %v35 = vld [vmem:[%s1 + $0x40] sm:$0xf]
  %v36 = vld [vmem:[%s1 + $0x44] sm:$0xf]
  %v37 = vld [vmem:[%s2] sm:$0xff]
  %v38 = vld [vmem:[%s2 + $0x8] sm:$0xff]
  %v39 = vld [vmem:[%s2 + $0x10] sm:$0xff]
  %v40 = vld [vmem:[%s2 + $0x18] sm:$0xff]
  %42 = vset.pattern.permute.xlu0 0
  %43 = vperm.xlu0 %42, %v37
  %v44 = vpop.permute.xlu0 %43
  %47 = vset.pattern.permute.xlu0 0
  %48 = vperm.xlu0 %47, %v38
  %v49 = vpop.permute.xlu0 %48
  %52 = vset.pattern.permute.xlu0 0
  %53 = vperm.xlu0 %52, %v39
  %v54 = vpop.permute.xlu0 %53
  %57 = vset.pattern.permute.xlu0 0
  %58 = vperm.xlu0 %57, %v40
  %v59 = vpop.permute.xlu0 %58
  %v65 = vunpack.c.l.b16 %v15
  %v66 = vunpack.c.h.b16 %v15
  %v67 = vunpack.c.l.b16 %v16
  %v68 = vunpack.c.h.b16 %v16
  %v69 = vunpack.c.l.b16 %v17
  %v70 = vunpack.c.h.b16 %v17
  %v71 = vunpack.c.l.b16 %v18
  %v72 = vunpack.c.h.b16 %v18
  %v73 = vpack.c.b16 %v67, %v65
  %v74 = vpack.c.b16 %v68, %v66
  %v75 = vpack.c.b16 %v71, %v69
  %v76 = vpack.c.b16 %v72, %v70
  %v97 = vunpack.c.l.b16 %v19
  %v98 = vunpack.c.l.b16 %v20
  %v99 = vunpack.c.l.b16 %v21
  %v100 = vunpack.c.l.b16 %v22
  %v101 = vunpack.c.l.b16 %v23
  %v102 = vunpack.c.l.b16 %v24
  %v103 = vunpack.c.l.b16 %v25
  %v104 = vunpack.c.l.b16 %v26
  %v105 = vunpack.c.l.b16 %v27
  %v106 = vunpack.c.l.b16 %v28
  %v107 = vunpack.c.l.b16 %v29
  %v108 = vunpack.c.l.b16 %v30
  %v109 = vunpack.c.l.b16 %v31
  %v110 = vunpack.c.l.b16 %v32
  %v111 = vunpack.c.l.b16 %v33
  %v112 = vunpack.c.l.b16 %v34
  %v113 = vunpack.c.l.b16 %v35
  %v114 = vunpack.c.l.b16 %v36
  %v115 = vpack.c.b16 %v98, %v97
  %v116 = vpack.c.b16 %v100, %v99
  %v117 = vpack.c.b16 %v102, %v101
  %v118 = vpack.c.b16 %v104, %v103
  %v119 = vpack.c.b16 %v106, %v105
  %v120 = vpack.c.b16 %v108, %v107
  %v121 = vpack.c.b16 %v110, %v109
  %v122 = vpack.c.b16 %v112, %v111
  %v123 = vpack.c.b16 %v114, %v113
  %vm133 = vcmask 130048
  %v135 = vsel %vm133, %v74, 0
  %v138 = vsel %vm133, %v76, 0
  %140 = vmatprep.subr.bf16.mxu0 0
  %141 = vmatpush1.bf16.msra.mxu0 %v122
  %142 = vmatprep.subr.bf16.mxu0 0
  %143 = vmatpush1.bf16.msra.mxu0 %v121
  %144 = vmatprep.subr.bf16.mxu0 0
  %145 = vmatpush1.bf16.msra.mxu0 %v120
  %146 = vmatprep.subr.bf16.mxu0 0
  %147 = vmatpush1.bf16.msra.mxu0 %v119
  %148 = vmatprep.subr.bf16.mxu0 0
  %149 = vmatpush1.bf16.msra.mxu0 %v118
  %150 = vmatprep.subr.bf16.mxu0 0
  %151 = vmatpush1.bf16.msra.mxu0 %v117
  %152 = vmatprep.subr.bf16.mxu0 0
  %153 = vmatpush1.bf16.msra.mxu0 %v116
  %154 = vmatprep.subr.bf16.mxu0 0
  %155 = vmatpush1.bf16.msra.mxu0 %v115
  %156 = vmatprep.subr.bf16.mxu0 0
  %157 = vmatpush2.bf16.msra.mxu0 0
  %158 = vmatprep.subr.bf16.mxu0 0
  %159 = vmatpush2.bf16.msra.mxu0 0
  %160 = vmatprep.subr.bf16.mxu0 0
  %161 = vmatpush2.bf16.msra.mxu0 0
  %162 = vmatprep.subr.bf16.mxu0 0
  %163 = vmatpush2.bf16.msra.mxu0 0
  %164 = vmatprep.subr.bf16.mxu0 0
  %165 = vmatpush2.bf16.msra.mxu0 0
  %166 = vmatprep.subr.bf16.mxu0 0
  %167 = vmatpush2.bf16.msra.mxu0 0
  %168 = vmatprep.subr.bf16.mxu0 0
  %169 = vmatpush2.bf16.msra.mxu0 0
  %170 = vmatprep.subr.bf16.mxu0 0
  %171 = vmatpush2.bf16.msra.mxu0 %v123
  %172 = vmatprep.mubr.bf16.mxu0 %v135
  %173 = vmatmul.mubr.bf16.gmra.mxu0 %v73
  %v174 = vpop.f32.mrf.mxu0
  %v175 = vadd.f32 %v44, %v174
  %v176 = vpop.f32.mrf.mxu0
  %v177 = vpop.f32.mrf.mxu0
  %v178 = vadd.f32 %v49, %v177
  %v179 = vpop.f32.mrf.mxu0
  %180 = vmatprep.mubr.bf16.mxu0 %v138
  %181 = vmatmul.mubr.bf16.gmra.mxu0 %v75
  %v182 = vpop.f32.mrf.mxu0
  %v183 = vadd.f32 %v54, %v182
  %v184 = vpop.f32.mrf.mxu0
  %v185 = vpop.f32.mrf.mxu0
  %v186 = vadd.f32 %v59, %v185
  %v187 = vpop.f32.mrf.mxu0
  %188 = vdwg.mxu0
  %v189 = vmax.f32 %v175, 0.0
  %v190 = vmax.f32 %v178, 0.0
  %v191 = vmax.f32 %v183, 0.0
  %v192 = vmax.f32 %v186, 0.0
  %193 = vst [vmem:[%s3] sm:$0xff] %v189
  %194 = vst [vmem:[%s3 + $0x8] sm:$0xff] %v190
  %195 = vst [vmem:[%s3 + $0x10] sm:$0xff] %v191
  %196 = vst [vmem:[%s3 + $0x18] sm:$0xff] %v192
  // Predicated region
  $region14: #{cgan_forward.13} parent=0 // pred_check
    _
  $region15: #{cgan_forward.13} parent=0 // pred_check_branch
    %198 = sbr.rel (0) target = $region17
  $region16: #{cgan_forward.13} parent=0 // pred_region
    _
  $region17: #{cgan_forward.13} parent=0 // pred_fallthru
    _
  // Predicated region
  $region18: #{cgan_forward.13} parent=0 // pred_check
    _
  $region19: #{cgan_forward.13} parent=0 // pred_check_branch
    %200 = sbr.rel (0) target = $region21
  $region20: #{cgan_forward.13} parent=0 // pred_region
    _
  $region21: #{cgan_forward.13} parent=0 // pred_fallthru
    _

// kernel: cgan_forward.14
$region0: #{cgan_forward.14}
  #allocation0 [shape = 'u32[]', space=smem, size = 0x4, offset = 0x4, fixed_abs, tag = 'smem constant byte address 0x4 - core index']
  #allocation1 [shape = 'u32[144,128]{1,0:T(1,128)}', space=vmem, size = 0x12000, scoped, tag = 'internal scratch']
  %s0 = inlined_call_operand.vmem [shape: bf16[32,288], index: 0, kind: input, shape index: {}]
  %s1 = inlined_call_operand.vmem [shape: bf16[288,128], index: 1, kind: input, shape index: {}]
  %s2 = inlined_call_operand.vmem [shape: f32[32,1], index: 2, kind: input, shape index: {}]
  %s3 = inlined_call_operand.vmem [shape: f32[32,128], index: 3, kind: output, shape index: {}]
  %s4 = sld [smem:[#allocation0]]
  $region22: #{cgan_forward.14} parent=0
    _
  %s6 = ssub.s32 1, %s4
  %s7 = scalar_select 0, %s6, %s4
  // Predicated region
  $region2: #{cgan_forward.14} parent=0 // pred_check
    _
  $region3: #{cgan_forward.14} parent=0 // pred_check_branch
    %9 = sbr.rel (0) target = $region5
  $region4: #{cgan_forward.14} parent=0 // pred_region
    _
  $region5: #{cgan_forward.14} parent=0 // pred_fallthru
    _
  // Predicated region
  $region6: #{cgan_forward.14} parent=0 // pred_check
    _
  $region7: #{cgan_forward.14} parent=0 // pred_check_branch
    %11 = sbr.rel (0) target = $region9
  $region8: #{cgan_forward.14} parent=0 // pred_region
    _
  $region9: #{cgan_forward.14} parent=0 // pred_fallthru
    _
  // Predicated region
  $region10: #{cgan_forward.14} parent=0 // pred_check
    _
  $region11: #{cgan_forward.14} parent=0 // pred_check_branch
    %13 = sbr.rel (0) target = $region13
  $region12: #{cgan_forward.14} parent=0 // pred_region
    _
  $region13: #{cgan_forward.14} parent=0 // pred_fallthru
    _
  %v15 = vld [vmem:[%s0] sm:$0xff]
  %v16 = vld [vmem:[%s0 + $0x8] sm:$0xf]
  %v17 = vld [vmem:[%s0 + $0xc] sm:$0xff]
  %v18 = vld [vmem:[%s0 + $0x14] sm:$0xf]
  %v19 = vld [vmem:[%s0 + $0x18] sm:$0xff]
  %v20 = vld [vmem:[%s0 + $0x20] sm:$0xf]
  %v21 = vld [vmem:[%s0 + $0x24] sm:$0xff]
  %v22 = vld [vmem:[%s0 + $0x2c] sm:$0xf]
  %v23 = vld [vmem:[%s1] sm:$0xf]
  %v24 = vld [vmem:[%s1 + $0x4] sm:$0xf]
  %v25 = vld [vmem:[%s1 + $0x8] sm:$0xf]
  %v26 = vld [vmem:[%s1 + $0xc] sm:$0xf]
  %v27 = vld [vmem:[%s1 + $0x10] sm:$0xf]
  %v28 = vld [vmem:[%s1 + $0x14] sm:$0xf]
  %v29 = vld [vmem:[%s1 + $0x18] sm:$0xf]
  %v30 = vld [vmem:[%s1 + $0x1c] sm:$0xf]
  %v31 = vld [vmem:[%s1 + $0x20] sm:$0xf]
  %v32 = vld [vmem:[%s1 + $0x24] sm:$0xf]
  %v33 = vld [vmem:[%s1 + $0x28] sm:$0xf]
  %v34 = vld [vmem:[%s1 + $0x2c] sm:$0xf]
  %v35 = vld [vmem:[%s1 + $0x30] sm:$0xf]
  %v36 = vld [vmem:[%s1 + $0x34] sm:$0xf]
  %v37 = vld [vmem:[%s1 + $0x38] sm:$0xf]
  %v38 = vld [vmem:[%s1 + $0x3c] sm:$0xf]
  %v39 = vld [vmem:[%s1 + $0x40] sm:$0xf]
  %v40 = vld [vmem:[%s1 + $0x44] sm:$0xf]
  %v41 = vld [vmem:[%s1 + $0x48] sm:$0xf]
  %v42 = vld [vmem:[%s1 + $0x4c] sm:$0xf]
  %v43 = vld [vmem:[%s1 + $0x50] sm:$0xf]
  %v44 = vld [vmem:[%s1 + $0x54] sm:$0xf]
  %v45 = vld [vmem:[%s1 + $0x58] sm:$0xf]
  %v46 = vld [vmem:[%s1 + $0x5c] sm:$0xf]
  %v47 = vld [vmem:[%s1 + $0x60] sm:$0xf]
  %v48 = vld [vmem:[%s1 + $0x64] sm:$0xf]
  %v49 = vld [vmem:[%s1 + $0x68] sm:$0xf]
  %v50 = vld [vmem:[%s1 + $0x6c] sm:$0xf]
  %v51 = vld [vmem:[%s1 + $0x70] sm:$0xf]
  %v52 = vld [vmem:[%s1 + $0x74] sm:$0xf]
  %v53 = vld [vmem:[%s1 + $0x78] sm:$0xf]
  %v54 = vld [vmem:[%s1 + $0x7c] sm:$0xf]
  %v55 = vld [vmem:[%s1 + $0x80] sm:$0xf]
  %v56 = vld [vmem:[%s1 + $0x84] sm:$0xf]
  %v57 = vld [vmem:[%s1 + $0x88] sm:$0xf]
  %v58 = vld [vmem:[%s1 + $0x8c] sm:$0xf]
  %v59 = vld [vmem:[%s2] sm:$0xff]
  %v60 = vld [vmem:[%s2 + $0x8] sm:$0xff]
  %v61 = vld [vmem:[%s2 + $0x10] sm:$0xff]
  %v62 = vld [vmem:[%s2 + $0x18] sm:$0xff]
  %64 = vset.pattern.permute.xlu0 0
  %65 = vperm.xlu0 %64, %v59
  %v66 = vpop.permute.xlu0 %65
  %69 = vset.pattern.permute.xlu0 0
  %70 = vperm.xlu0 %69, %v60
  %v71 = vpop.permute.xlu0 %70
  %74 = vset.pattern.permute.xlu0 0
  %75 = vperm.xlu0 %74, %v61
  %v76 = vpop.permute.xlu0 %75
  %79 = vset.pattern.permute.xlu0 0
  %80 = vperm.xlu0 %79, %v62
  %v81 = vpop.permute.xlu0 %80
  %v91 = vunpack.c.l.b16 %v15
  %v92 = vunpack.c.h.b16 %v15
  %v93 = vunpack.c.l.b16 %v16
  %v94 = vunpack.c.l.b16 %v17
  %v95 = vunpack.c.h.b16 %v17
  %v96 = vunpack.c.l.b16 %v18
  %v97 = vunpack.c.l.b16 %v19
  %v98 = vunpack.c.h.b16 %v19
  %v99 = vunpack.c.l.b16 %v20
  %v100 = vunpack.c.l.b16 %v21
  %v101 = vunpack.c.h.b16 %v21
  %v102 = vunpack.c.l.b16 %v22
  %v103 = vpack.c.b16 %v94, %v91
  %v104 = vpack.c.b16 %v95, %v92
  %v105 = vpack.c.b16 %v96, %v93
  %v106 = vpack.c.b16 %v100, %v97
  %v107 = vpack.c.b16 %v101, %v98
  %v108 = vpack.c.b16 %v102, %v99
  %v149 = vunpack.c.l.b16 %v23
  %v150 = vunpack.c.l.b16 %v24
  %v151 = vunpack.c.l.b16 %v25
  %v152 = vunpack.c.l.b16 %v26
  %v153 = vunpack.c.l.b16 %v27
  %v154 = vunpack.c.l.b16 %v28
  %v155 = vunpack.c.l.b16 %v29
  %v156 = vunpack.c.l.b16 %v30
  %v157 = vunpack.c.l.b16 %v31
  %v158 = vunpack.c.l.b16 %v32
  %v159 = vunpack.c.l.b16 %v33
  %v160 = vunpack.c.l.b16 %v34
  %v161 = vunpack.c.l.b16 %v35
  %v162 = vunpack.c.l.b16 %v36
  %v163 = vunpack.c.l.b16 %v37
  %v164 = vunpack.c.l.b16 %v38
  %v165 = vunpack.c.l.b16 %v39
  %v166 = vunpack.c.l.b16 %v40
  %v167 = vunpack.c.l.b16 %v41
  %v168 = vunpack.c.l.b16 %v42
  %v169 = vunpack.c.l.b16 %v43
  %v170 = vunpack.c.l.b16 %v44
  %v171 = vunpack.c.l.b16 %v45
  %v172 = vunpack.c.l.b16 %v46
  %v173 = vunpack.c.l.b16 %v47
  %v174 = vunpack.c.l.b16 %v48
  %v175 = vunpack.c.l.b16 %v49
  %v176 = vunpack.c.l.b16 %v50
  %v177 = vunpack.c.l.b16 %v51
  %v178 = vunpack.c.l.b16 %v52
  %v179 = vunpack.c.l.b16 %v53
  %v180 = vunpack.c.l.b16 %v54
  %v181 = vunpack.c.l.b16 %v55
  %v182 = vunpack.c.l.b16 %v56
  %v183 = vunpack.c.l.b16 %v57
  %v184 = vunpack.c.l.b16 %v58
  %v185 = vpack.c.b16 %v150, %v149
  %v186 = vpack.c.b16 %v152, %v151
  %v187 = vpack.c.b16 %v154, %v153
  %v188 = vpack.c.b16 %v156, %v155
  %v189 = vpack.c.b16 %v158, %v157
  %v190 = vpack.c.b16 %v160, %v159
  %v191 = vpack.c.b16 %v162, %v161
  %v192 = vpack.c.b16 %v164, %v163
  %v193 = vpack.c.b16 %v166, %v165
  %v194 = vpack.c.b16 %v168, %v167
  %v195 = vpack.c.b16 %v170, %v169
  %v196 = vpack.c.b16 %v172, %v171
  %v197 = vpack.c.b16 %v174, %v173
  %v198 = vpack.c.b16 %v176, %v175
  %v199 = vpack.c.b16 %v178, %v177
  %v200 = vpack.c.b16 %v180, %v179
  %v201 = vpack.c.b16 %v182, %v181
  %v202 = vpack.c.b16 %v184, %v183
  %vm221 = vcmask 261120
  %v223 = vsel %vm221, %v105, 0
  %v226 = vsel %vm221, %v108, 0
  %228 = vmatprep.subr.bf16.mxu0 0
  %229 = vmatpush1.bf16.msra.mxu0 %v192
  %230 = vmatprep.subr.bf16.mxu0 0
  %231 = vmatpush1.bf16.msra.mxu0 %v191
  %232 = vmatprep.subr.bf16.mxu0 0
  %233 = vmatpush1.bf16.msra.mxu0 %v190
  %234 = vmatprep.subr.bf16.mxu0 0
  %235 = vmatpush1.bf16.msra.mxu0 %v189
  %236 = vmatprep.subr.bf16.mxu0 0
  %237 = vmatpush1.bf16.msra.mxu0 %v188
  %238 = vmatprep.subr.bf16.mxu0 0
  %239 = vmatpush1.bf16.msra.mxu0 %v187
  %240 = vmatprep.subr.bf16.mxu0 0
  %241 = vmatpush1.bf16.msra.mxu0 %v186
  %242 = vmatprep.subr.bf16.mxu0 0
  %243 = vmatpush1.bf16.msra.mxu0 %v185
  %244 = vmatprep.subr.bf16.mxu0 0
  %245 = vmatpush2.bf16.msra.mxu0 %v200
  %246 = vmatprep.subr.bf16.mxu0 0
  %247 = vmatpush2.bf16.msra.mxu0 %v199
  %248 = vmatprep.subr.bf16.mxu0 0
  %249 = vmatpush2.bf16.msra.mxu0 %v198
  %250 = vmatprep.subr.bf16.mxu0 0
  %251 = vmatpush2.bf16.msra.mxu0 %v197
  %252 = vmatprep.subr.bf16.mxu0 0
  %253 = vmatpush2.bf16.msra.mxu0 %v196
  %254 = vmatprep.subr.bf16.mxu0 0
  %255 = vmatpush2.bf16.msra.mxu0 %v195
  %256 = vmatprep.subr.bf16.mxu0 0
  %257 = vmatpush2.bf16.msra.mxu0 %v194
  %258 = vmatprep.subr.bf16.mxu0 0
  %259 = vmatpush2.bf16.msra.mxu0 %v193
  %260 = vmatprep.mubr.bf16.mxu0 %v104
  %261 = vmatmul.mubr.bf16.gmra.mxu0 %v103
  %v262 = vpop.f32.mrf.mxu0
  %v263 = vadd.f32 %v66, %v262
  %v264 = vpop.f32.mrf.mxu0
  %v265 = vpop.f32.mrf.mxu0
  %v266 = vadd.f32 %v71, %v265
  %v267 = vpop.f32.mrf.mxu0
  %268 = vmatprep.mubr.bf16.mxu0 %v107
  %269 = vmatmul.mubr.bf16.gmra.mxu0 %v106
  %v270 = vpop.f32.mrf.mxu0
  %v271 = vadd.f32 %v76, %v270
  %v272 = vpop.f32.mrf.mxu0
  %v273 = vpop.f32.mrf.mxu0
  %v274 = vadd.f32 %v81, %v273
  %v275 = vpop.f32.mrf.mxu0
  %276 = vdwg.mxu0
  %277 = vmatprep.subr.bf16.mxu0 0
  %278 = vmatpush1.bf16.msra.mxu0 0
  %279 = vmatprep.subr.bf16.mxu0 0
  %280 = vmatpush1.bf16.msra.mxu0 0
  %281 = vmatprep.subr.bf16.mxu0 0
  %282 = vmatpush1.bf16.msra.mxu0 0
  %283 = vmatprep.subr.bf16.mxu0 0
  %284 = vmatpush1.bf16.msra.mxu0 0
  %285 = vmatprep.subr.bf16.mxu0 0
  %286 = vmatpush1.bf16.msra.mxu0 0
  %287 = vmatprep.subr.bf16.mxu0 0
  %288 = vmatpush1.bf16.msra.mxu0 0
  %289 = vmatprep.subr.bf16.mxu0 0
  %290 = vmatpush1.bf16.msra.mxu0 %v202
  %291 = vmatprep.subr.bf16.mxu0 0
  %292 = vmatpush1.bf16.msra.mxu0 %v201
  %293 = vmatprep.subr.bf16.mxu0 0
  %294 = vmatpush2.bf16.msra.mxu0 0
  %295 = vmatprep.subr.bf16.mxu0 0
  %296 = vmatpush2.bf16.msra.mxu0 0
  %297 = vmatprep.subr.bf16.mxu0 0
  %298 = vmatpush2.bf16.msra.mxu0 0
  %299 = vmatprep.subr.bf16.mxu0 0
  %300 = vmatpush2.bf16.msra.mxu0 0
  %301 = vmatprep.subr.bf16.mxu0 0
  %302 = vmatpush2.bf16.msra.mxu0 0
  %303 = vmatprep.subr.bf16.mxu0 0
  %304 = vmatpush2.bf16.msra.mxu0 0
  %305 = vmatprep.subr.bf16.mxu0 0
  %306 = vmatpush2.bf16.msra.mxu0 0
  %307 = vmatprep.subr.bf16.mxu0 0
  %308 = vmatpush2.bf16.msra.mxu0 0
  %309 = vmatprep.mubr.bf16.mxu0 0
  %310 = vmatmul.mubr.bf16.gmra.mxu0 %v223
  %v311 = vpop.f32.mrf.mxu0
  %v312 = vadd.f32 %v263, %v311
  %v313 = vpop.f32.mrf.mxu0
  %v314 = vpop.f32.mrf.mxu0
  %v315 = vadd.f32 %v266, %v314
  %v316 = vpop.f32.mrf.mxu0
  %317 = vmatprep.mubr.bf16.mxu0 0
  %318 = vmatmul.mubr.bf16.gmra.mxu0 %v226
  %v319 = vpop.f32.mrf.mxu0
  %v320 = vadd.f32 %v271, %v319
  %v321 = vpop.f32.mrf.mxu0
  %v322 = vpop.f32.mrf.mxu0
  %v323 = vadd.f32 %v274, %v322
  %v324 = vpop.f32.mrf.mxu0
  %325 = vdwg.mxu0
  %v326 = vmax.f32 %v312, 0.0
  %v327 = vmax.f32 %v315, 0.0
  %v328 = vmax.f32 %v320, 0.0
  %v329 = vmax.f32 %v323, 0.0
  %330 = vst [vmem:[%s3] sm:$0xff] %v326
  %331 = vst [vmem:[%s3 + $0x8] sm:$0xff] %v327
  %332 = vst [vmem:[%s3 + $0x10] sm:$0xff] %v328
  %333 = vst [vmem:[%s3 + $0x18] sm:$0xff] %v329
  // Predicated region
  $region14: #{cgan_forward.14} parent=0 // pred_check
    _
  $region15: #{cgan_forward.14} parent=0 // pred_check_branch
    %335 = sbr.rel (0) target = $region17
  $region16: #{cgan_forward.14} parent=0 // pred_region
    _
  $region17: #{cgan_forward.14} parent=0 // pred_fallthru
    _
  // Predicated region
  $region18: #{cgan_forward.14} parent=0 // pred_check
    _
  $region19: #{cgan_forward.14} parent=0 // pred_check_branch
    %337 = sbr.rel (0) target = $region21
  $region20: #{cgan_forward.14} parent=0 // pred_region
    _
  $region21: #{cgan_forward.14} parent=0 // pred_fallthru
    _

// kernel: cgan_forward.15
$region0: #{cgan_forward.15}
  #allocation0 [shape = 'u32[]', space=smem, size = 0x4, offset = 0x4, fixed_abs, tag = 'smem constant byte address 0x4 - core index']
  #allocation1 [shape = 'u32[144,128]{1,0:T(1,128)}', space=vmem, size = 0x12000, scoped, tag = 'internal scratch']
  %s0 = inlined_call_operand.vmem [shape: bf16[64,32], index: 0, kind: input, shape index: {}]
  %s1 = inlined_call_operand.vmem [shape: bf16[32,128], index: 1, kind: input, shape index: {}]
  %s2 = inlined_call_operand.vmem [shape: f32[64,1], index: 2, kind: input, shape index: {}]
  %s3 = inlined_call_operand.vmem [shape: f32[64,128], index: 3, kind: output, shape index: {}]
  %s4 = sld [smem:[#allocation0]]
  $region22: #{cgan_forward.15} parent=0
    _
  %s6 = ssub.s32 1, %s4
  %s7 = scalar_select 0, %s6, %s4
  // Predicated region
  $region2: #{cgan_forward.15} parent=0 // pred_check
    _
  $region3: #{cgan_forward.15} parent=0 // pred_check_branch
    %9 = sbr.rel (0) target = $region5
  $region4: #{cgan_forward.15} parent=0 // pred_region
    _
  $region5: #{cgan_forward.15} parent=0 // pred_fallthru
    _
  // Predicated region
  $region6: #{cgan_forward.15} parent=0 // pred_check
    _
  $region7: #{cgan_forward.15} parent=0 // pred_check_branch
    %11 = sbr.rel (0) target = $region9
  $region8: #{cgan_forward.15} parent=0 // pred_region
    _
  $region9: #{cgan_forward.15} parent=0 // pred_fallthru
    _
  // Predicated region
  $region10: #{cgan_forward.15} parent=0 // pred_check
    _
  $region11: #{cgan_forward.15} parent=0 // pred_check_branch
    %13 = sbr.rel (0) target = $region13
  $region12: #{cgan_forward.15} parent=0 // pred_region
    _
  $region13: #{cgan_forward.15} parent=0 // pred_fallthru
    _
  %v15 = vld [vmem:[%s0] sm:$0xf]
  %v16 = vld [vmem:[%s0 + $0x4] sm:$0xf]
  %v17 = vld [vmem:[%s0 + $0x8] sm:$0xf]
  %v18 = vld [vmem:[%s0 + $0xc] sm:$0xf]
  %v19 = vld [vmem:[%s0 + $0x10] sm:$0xf]
  %v20 = vld [vmem:[%s0 + $0x14] sm:$0xf]
  %v21 = vld [vmem:[%s0 + $0x18] sm:$0xf]
  %v22 = vld [vmem:[%s0 + $0x1c] sm:$0xf]
  %v23 = vld [vmem:[%s1] sm:$0xf]
  %v24 = vld [vmem:[%s1 + $0x4] sm:$0xf]
  %v25 = vld [vmem:[%s1 + $0x8] sm:$0xf]
  %v26 = vld [vmem:[%s1 + $0xc] sm:$0xf]
  %v27 = vld [vmem:[%s2] sm:$0xff]
  %v28 = vld [vmem:[%s2 + $0x8] sm:$0xff]
  %v29 = vld [vmem:[%s2 + $0x10] sm:$0xff]
  %v30 = vld [vmem:[%s2 + $0x18] sm:$0xff]
  %v31 = vld [vmem:[%s2 + $0x20] sm:$0xff]
  %v32 = vld [vmem:[%s2 + $0x28] sm:$0xff]
  %v33 = vld [vmem:[%s2 + $0x30] sm:$0xff]
  %v34 = vld [vmem:[%s2 + $0x38] sm:$0xff]
  %36 = vset.pattern.permute.xlu0 0
  %37 = vperm.xlu0 %36, %v27
  %v38 = vpop.permute.xlu0 %37
  %41 = vset.pattern.permute.xlu0 0
  %42 = vperm.xlu0 %41, %v28
  %v43 = vpop.permute.xlu0 %42
  %46 = vset.pattern.permute.xlu0 0
  %47 = vperm.xlu0 %46, %v29
  %v48 = vpop.permute.xlu0 %47
  %51 = vset.pattern.permute.xlu0 0
  %52 = vperm.xlu0 %51, %v30
  %v53 = vpop.permute.xlu0 %52
  %56 = vset.pattern.permute.xlu0 0
  %57 = vperm.xlu0 %56, %v31
  %v58 = vpop.permute.xlu0 %57
  %61 = vset.pattern.permute.xlu0 0
  %62 = vperm.xlu0 %61, %v32
  %v63 = vpop.permute.xlu0 %62
  %66 = vset.pattern.permute.xlu0 0
  %67 = vperm.xlu0 %66, %v33
  %v68 = vpop.permute.xlu0 %67
  %71 = vset.pattern.permute.xlu0 0
  %72 = vperm.xlu0 %71, %v34
  %v73 = vpop.permute.xlu0 %72
  %v83 = vunpack.c.l.b16 %v15
  %v84 = vunpack.c.l.b16 %v16
  %v85 = vunpack.c.l.b16 %v17
  %v86 = vunpack.c.l.b16 %v18
  %v87 = vunpack.c.l.b16 %v19
  %v88 = vunpack.c.l.b16 %v20
  %v89 = vunpack.c.l.b16 %v21
  %v90 = vunpack.c.l.b16 %v22
  %v91 = vpack.c.b16 %v84, %v83
  %v92 = vpack.c.b16 %v86, %v85
  %v93 = vpack.c.b16 %v88, %v87
  %v94 = vpack.c.b16 %v90, %v89
  %v99 = vunpack.c.l.b16 %v23
  %v100 = vunpack.c.l.b16 %v24
  %v101 = vunpack.c.l.b16 %v25
  %v102 = vunpack.c.l.b16 %v26
  %v103 = vpack.c.b16 %v100, %v99
  %v104 = vpack.c.b16 %v102, %v101
  %vm107 = vcmask 261120
  %v109 = vsel %vm107, %v91, 0
  %v112 = vsel %vm107, %v92, 0
  %v115 = vsel %vm107, %v93, 0
  %v118 = vsel %vm107, %v94, 0
  %120 = vmatprep.subr.bf16.mxu0 0
  %121 = vmatpush1.bf16.msra.mxu0 0
  %122 = vmatprep.subr.bf16.mxu0 0
  %123 = vmatpush1.bf16.msra.mxu0 0
  %124 = vmatprep.subr.bf16.mxu0 0
  %125 = vmatpush1.bf16.msra.mxu0 0
  %126 = vmatprep.subr.bf16.mxu0 0
  %127 = vmatpush1.bf16.msra.mxu0 0
  %128 = vmatprep.subr.bf16.mxu0 0
  %129 = vmatpush1.bf16.msra.mxu0 0
  %130 = vmatprep.subr.bf16.mxu0 0
  %131 = vmatpush1.bf16.msra.mxu0 0
  %132 = vmatprep.subr.bf16.mxu0 0
  %133 = vmatpush1.bf16.msra.mxu0 %v104
  %134 = vmatprep.subr.bf16.mxu0 0
  %135 = vmatpush1.bf16.msra.mxu0 %v103
  %136 = vmatprep.subr.bf16.mxu0 0
  %137 = vmatpush2.bf16.msra.mxu0 0
  %138 = vmatprep.subr.bf16.mxu0 0
  %139 = vmatpush2.bf16.msra.mxu0 0
  %140 = vmatprep.subr.bf16.mxu0 0
  %141 = vmatpush2.bf16.msra.mxu0 0
  %142 = vmatprep.subr.bf16.mxu0 0
  %143 = vmatpush2.bf16.msra.mxu0 0
  %144 = vmatprep.subr.bf16.mxu0 0
  %145 = vmatpush2.bf16.msra.mxu0 0
  %146 = vmatprep.subr.bf16.mxu0 0
  %147 = vmatpush2.bf16.msra.mxu0 0
  %148 = vmatprep.subr.bf16.mxu0 0
  %149 = vmatpush2.bf16.msra.mxu0 0
  %150 = vmatprep.subr.bf16.mxu0 0
  %151 = vmatpush2.bf16.msra.mxu0 0
  %152 = vmatprep.mubr.bf16.mxu0 0
  %153 = vmatmul.mubr.bf16.gmra.mxu0 %v109
  %v154 = vpop.f32.mrf.mxu0
  %v155 = vadd.f32 %v38, %v154
  %v156 = vpop.f32.mrf.mxu0
  %v157 = vpop.f32.mrf.mxu0
  %v158 = vadd.f32 %v43, %v157
  %v159 = vpop.f32.mrf.mxu0
  %160 = vmatprep.mubr.bf16.mxu0 0
  %161 = vmatmul.mubr.bf16.gmra.mxu0 %v112
  %v162 = vpop.f32.mrf.mxu0
  %v163 = vadd.f32 %v48, %v162
  %v164 = vpop.f32.mrf.mxu0
  %v165 = vpop.f32.mrf.mxu0
  %v166 = vadd.f32 %v53, %v165
  %v167 = vpop.f32.mrf.mxu0
  %168 = vmatprep.mubr.bf16.mxu0 0
  %169 = vmatmul.mubr.bf16.gmra.mxu0 %v115
  %v170 = vpop.f32.mrf.mxu0
  %v171 = vadd.f32 %v58, %v170
  %v172 = vpop.f32.mrf.mxu0
  %v173 = vpop.f32.mrf.mxu0
  %v174 = vadd.f32 %v63, %v173
  %v175 = vpop.f32.mrf.mxu0
  %176 = vmatprep.mubr.bf16.mxu0 0
  %177 = vmatmul.mubr.bf16.gmra.mxu0 %v118
  %v178 = vpop.f32.mrf.mxu0
  %v179 = vadd.f32 %v68, %v178
  %v180 = vpop.f32.mrf.mxu0
  %v181 = vpop.f32.mrf.mxu0
  %v182 = vadd.f32 %v73, %v181
  %v183 = vpop.f32.mrf.mxu0
  %184 = vdwg.mxu0
  %185 = vst [vmem:[%s3] sm:$0xff] %v155
  %186 = vst [vmem:[%s3 + $0x8] sm:$0xff] %v158
  %187 = vst [vmem:[%s3 + $0x10] sm:$0xff] %v163
  %188 = vst [vmem:[%s3 + $0x18] sm:$0xff] %v166
  %189 = vst [vmem:[%s3 + $0x20] sm:$0xff] %v171
  %190 = vst [vmem:[%s3 + $0x28] sm:$0xff] %v174
  %191 = vst [vmem:[%s3 + $0x30] sm:$0xff] %v179
  %192 = vst [vmem:[%s3 + $0x38] sm:$0xff] %v182
  // Predicated region
  $region14: #{cgan_forward.15} parent=0 // pred_check
    _
  $region15: #{cgan_forward.15} parent=0 // pred_check_branch
    %194 = sbr.rel (0) target = $region17
  $region16: #{cgan_forward.15} parent=0 // pred_region
    _
  $region17: #{cgan_forward.15} parent=0 // pred_fallthru
    _
  // Predicated region
  $region18: #{cgan_forward.15} parent=0 // pred_check
    _
  $region19: #{cgan_forward.15} parent=0 // pred_check_branch
    %196 = sbr.rel (0) target = $region21
  $region20: #{cgan_forward.15} parent=0 // pred_region
    _
  $region21: #{cgan_forward.15} parent=0 // pred_fallthru
    _

// kernel: cgan_forward.16
$region0: #{cgan_forward.16}
  #allocation0 [shape = 'u32[]', space=smem, size = 0x4, offset = 0x4, fixed_abs, tag = 'smem constant byte address 0x4 - core index']
  #allocation1 [shape = 'u32[144,128]{1,0:T(1,128)}', space=vmem, size = 0x12000, scoped, tag = 'internal scratch']
  %s0 = inlined_call_operand.vmem [shape: bf16[16,288], index: 0, kind: input, shape index: {}]
  %s1 = inlined_call_operand.vmem [shape: bf16[288,512], index: 1, kind: input, shape index: {}]
  %s2 = inlined_call_operand.vmem [shape: f32[16,1], index: 2, kind: input, shape index: {}]
  %s3 = inlined_call_operand.vmem [shape: f32[16,512], index: 3, kind: output, shape index: {}]
  %s4 = sld [smem:[#allocation0]]
  $region22: #{cgan_forward.16} parent=0
    _
  %s6 = ssub.s32 1, %s4
  %s7 = scalar_select 0, %s6, %s4
  // Predicated region
  $region2: #{cgan_forward.16} parent=0 // pred_check
    _
  $region3: #{cgan_forward.16} parent=0 // pred_check_branch
    %9 = sbr.rel (0) target = $region5
  $region4: #{cgan_forward.16} parent=0 // pred_region
    _
  $region5: #{cgan_forward.16} parent=0 // pred_fallthru
    _
  // Predicated region
  $region6: #{cgan_forward.16} parent=0 // pred_check
    _
  $region7: #{cgan_forward.16} parent=0 // pred_check_branch
    %11 = sbr.rel (0) target = $region9
  $region8: #{cgan_forward.16} parent=0 // pred_region
    _
  $region9: #{cgan_forward.16} parent=0 // pred_fallthru
    _
  // Predicated region
  $region10: #{cgan_forward.16} parent=0 // pred_check
    _
  $region11: #{cgan_forward.16} parent=0 // pred_check_branch
    %13 = sbr.rel (0) target = $region13
  $region12: #{cgan_forward.16} parent=0 // pred_region
    _
  $region13: #{cgan_forward.16} parent=0 // pred_fallthru
    _
  %v15 = vld [vmem:[%s0] sm:$0xff]
  %v16 = vld [vmem:[%s0 + $0x8] sm:$0xf]
  %v17 = vld [vmem:[%s0 + $0xc] sm:$0xff]
  %v18 = vld [vmem:[%s0 + $0x14] sm:$0xf]
  %v19 = vld [vmem:[%s1] sm:$0xff]
  %v20 = vld [vmem:[%s1 + $0x8] sm:$0xff]
  %v21 = vld [vmem:[%s1 + $0x10] sm:$0xff]
  %v22 = vld [vmem:[%s1 + $0x18] sm:$0xff]
  %v23 = vld [vmem:[%s1 + $0x20] sm:$0xff]
  %v24 = vld [vmem:[%s1 + $0x28] sm:$0xff]
  %v25 = vld [vmem:[%s1 + $0x30] sm:$0xff]
  %v26 = vld [vmem:[%s1 + $0x38] sm:$0xff]
  %v27 = vld [vmem:[%s1 + $0x40] sm:$0xff]
  %v28 = vld [vmem:[%s1 + $0x48] sm:$0xff]
  %v29 = vld [vmem:[%s1 + $0x50] sm:$0xff]
  %v30 = vld [vmem:[%s1 + $0x58] sm:$0xff]
  %v31 = vld [vmem:[%s1 + $0x60] sm:$0xff]
  %v32 = vld [vmem:[%s1 + $0x68] sm:$0xff]
  %v33 = vld [vmem:[%s1 + $0x70] sm:$0xff]
  %v34 = vld [vmem:[%s1 + $0x78] sm:$0xff]
  %v35 = vld [vmem:[%s1 + $0x80] sm:$0xff]
  %v36 = vld [vmem:[%s1 + $0x88] sm:$0xff]
  %v37 = vld [vmem:[%s1 + $0x90] sm:$0xff]
  %v38 = vld [vmem:[%s1 + $0x98] sm:$0xff]
  %v39 = vld [vmem:[%s1 + $0xa0] sm:$0xff]
  %v40 = vld [vmem:[%s1 + $0xa8] sm:$0xff]
  %v41 = vld [vmem:[%s1 + $0xb0] sm:$0xff]
  %v42 = vld [vmem:[%s1 + $0xb8] sm:$0xff]
  %v43 = vld [vmem:[%s1 + $0xc0] sm:$0xff]
  %v44 = vld [vmem:[%s1 + $0xc8] sm:$0xff]
  %v45 = vld [vmem:[%s1 + $0xd0] sm:$0xff]
  %v46 = vld [vmem:[%s1 + $0xd8] sm:$0xff]
  %v47 = vld [vmem:[%s1 + $0xe0] sm:$0xff]
  %v48 = vld [vmem:[%s1 + $0xe8] sm:$0xff]
  %v49 = vld [vmem:[%s1 + $0xf0] sm:$0xff]
  %v50 = vld [vmem:[%s1 + $0xf8] sm:$0xff]
  %v51 = vld [vmem:[%s1 + $0x100] sm:$0xff]
  %v52 = vld [vmem:[%s1 + $0x108] sm:$0xff]
  %v53 = vld [vmem:[%s1 + $0x110] sm:$0xff]
  %v54 = vld [vmem:[%s1 + $0x118] sm:$0xff]
  %v55 = vld [vmem:[%s1 + $0x120] sm:$0xff]
  %v56 = vld [vmem:[%s1 + $0x128] sm:$0xff]
  %v57 = vld [vmem:[%s1 + $0x130] sm:$0xff]
  %v58 = vld [vmem:[%s1 + $0x138] sm:$0xff]
  %v59 = vld [vmem:[%s1 + $0x140] sm:$0xff]
  %v60 = vld [vmem:[%s1 + $0x148] sm:$0xff]
  %v61 = vld [vmem:[%s1 + $0x150] sm:$0xff]
  %v62 = vld [vmem:[%s1 + $0x158] sm:$0xff]
  %v63 = vld [vmem:[%s1 + $0x160] sm:$0xff]
  %v64 = vld [vmem:[%s1 + $0x168] sm:$0xff]
  %v65 = vld [vmem:[%s1 + $0x170] sm:$0xff]
  %v66 = vld [vmem:[%s1 + $0x178] sm:$0xff]
  %v67 = vld [vmem:[%s1 + $0x180] sm:$0xff]
  %v68 = vld [vmem:[%s1 + $0x188] sm:$0xff]
  %v69 = vld [vmem:[%s1 + $0x190] sm:$0xff]
  %v70 = vld [vmem:[%s1 + $0x198] sm:$0xff]
  %v71 = vld [vmem:[%s1 + $0x1a0] sm:$0xff]
  %v72 = vld [vmem:[%s1 + $0x1a8] sm:$0xff]
  %v73 = vld [vmem:[%s1 + $0x1b0] sm:$0xff]
  %v74 = vld [vmem:[%s1 + $0x1b8] sm:$0xff]
  %v75 = vld [vmem:[%s1 + $0x1c0] sm:$0xff]
  %v76 = vld [vmem:[%s1 + $0x1c8] sm:$0xff]
  %v77 = vld [vmem:[%s1 + $0x1d0] sm:$0xff]
  %v78 = vld [vmem:[%s1 + $0x1d8] sm:$0xff]
  %v79 = vld [vmem:[%s1 + $0x1e0] sm:$0xff]
  %v80 = vld [vmem:[%s1 + $0x1e8] sm:$0xff]
  %v81 = vld [vmem:[%s1 + $0x1f0] sm:$0xff]
  %v82 = vld [vmem:[%s1 + $0x1f8] sm:$0xff]
  %v83 = vld [vmem:[%s1 + $0x200] sm:$0xff]
  %v84 = vld [vmem:[%s1 + $0x208] sm:$0xff]
  %v85 = vld [vmem:[%s1 + $0x210] sm:$0xff]
  %v86 = vld [vmem:[%s1 + $0x218] sm:$0xff]
  %v87 = vld [vmem:[%s1 + $0x220] sm:$0xff]
  %v88 = vld [vmem:[%s1 + $0x228] sm:$0xff]
  %v89 = vld [vmem:[%s1 + $0x230] sm:$0xff]
  %v90 = vld [vmem:[%s1 + $0x238] sm:$0xff]
  %v91 = vld [vmem:[%s2] sm:$0xff]
  %v92 = vld [vmem:[%s2 + $0x8] sm:$0xff]
  %94 = vset.pattern.permute.xlu0 0
  %95 = vperm.xlu0 %94, %v91
  %v96 = vpop.permute.xlu0 %95
  %99 = vset.pattern.permute.xlu0 0
  %100 = vperm.xlu0 %99, %v92
  %v101 = vpop.permute.xlu0 %100
  %v107 = vunpack.c.l.b16 %v15
  %v108 = vunpack.c.h.b16 %v15
  %v109 = vunpack.c.l.b16 %v16
  %v110 = vunpack.c.l.b16 %v17
  %v111 = vunpack.c.h.b16 %v17
  %v112 = vunpack.c.l.b16 %v18
  %v113 = vpack.c.b16 %v110, %v107
  %v114 = vpack.c.b16 %v111, %v108
  %v115 = vpack.c.b16 %v112, %v109
  %v190 = vunpack.c.l.b16 %v19
  %v191 = vunpack.c.h.b16 %v19
  %v192 = vunpack.c.l.b16 %v20
  %v193 = vunpack.c.h.b16 %v20
  %v194 = vunpack.c.l.b16 %v21
  %v195 = vunpack.c.h.b16 %v21
  %v196 = vunpack.c.l.b16 %v22
  %v197 = vunpack.c.h.b16 %v22
  %v198 = vunpack.c.l.b16 %v23
  %v199 = vunpack.c.h.b16 %v23
  %v200 = vunpack.c.l.b16 %v24
  %v201 = vunpack.c.h.b16 %v24
  %v202 = vunpack.c.l.b16 %v25
  %v203 = vunpack.c.h.b16 %v25
  %v204 = vunpack.c.l.b16 %v26
  %v205 = vunpack.c.h.b16 %v26
  %v206 = vunpack.c.l.b16 %v27
  %v207 = vunpack.c.h.b16 %v27
  %v208 = vunpack.c.l.b16 %v28
  %v209 = vunpack.c.h.b16 %v28
  %v210 = vunpack.c.l.b16 %v29
  %v211 = vunpack.c.h.b16 %v29
  %v212 = vunpack.c.l.b16 %v30
  %v213 = vunpack.c.h.b16 %v30
  %v214 = vunpack.c.l.b16 %v31
  %v215 = vunpack.c.h.b16 %v31
  %v216 = vunpack.c.l.b16 %v32
  %v217 = vunpack.c.h.b16 %v32
  %v218 = vunpack.c.l.b16 %v33
  %v219 = vunpack.c.h.b16 %v33
  %v220 = vunpack.c.l.b16 %v34
  %v221 = vunpack.c.h.b16 %v34
  %v222 = vunpack.c.l.b16 %v35
  %v223 = vunpack.c.h.b16 %v35
  %v224 = vunpack.c.l.b16 %v36
  %v225 = vunpack.c.h.b16 %v36
  %v226 = vunpack.c.l.b16 %v37
  %v227 = vunpack.c.h.b16 %v37
  %v228 = vunpack.c.l.b16 %v38
  %v229 = vunpack.c.h.b16 %v38
  %v230 = vunpack.c.l.b16 %v39
  %v231 = vunpack.c.h.b16 %v39
  %v232 = vunpack.c.l.b16 %v40
  %v233 = vunpack.c.h.b16 %v40
  %v234 = vunpack.c.l.b16 %v41
  %v235 = vunpack.c.h.b16 %v41
  %v236 = vunpack.c.l.b16 %v42
  %v237 = vunpack.c.h.b16 %v42
  %v238 = vunpack.c.l.b16 %v43
  %v239 = vunpack.c.h.b16 %v43
  %v240 = vunpack.c.l.b16 %v44
  %v241 = vunpack.c.h.b16 %v44
  %v242 = vunpack.c.l.b16 %v45
  %v243 = vunpack.c.h.b16 %v45
  %v244 = vunpack.c.l.b16 %v46
  %v245 = vunpack.c.h.b16 %v46
  %v246 = vunpack.c.l.b16 %v47
  %v247 = vunpack.c.h.b16 %v47
  %v248 = vunpack.c.l.b16 %v48
  %v249 = vunpack.c.h.b16 %v48
  %v250 = vunpack.c.l.b16 %v49
  %v251 = vunpack.c.h.b16 %v49
  %v252 = vunpack.c.l.b16 %v50
  %v253 = vunpack.c.h.b16 %v50
  %v254 = vunpack.c.l.b16 %v51
  %v255 = vunpack.c.h.b16 %v51
  %v256 = vunpack.c.l.b16 %v52
  %v257 = vunpack.c.h.b16 %v52
  %v258 = vunpack.c.l.b16 %v53
  %v259 = vunpack.c.h.b16 %v53
  %v260 = vunpack.c.l.b16 %v54
  %v261 = vunpack.c.h.b16 %v54
  %v262 = vunpack.c.l.b16 %v55
  %v263 = vunpack.c.h.b16 %v55
  %v264 = vunpack.c.l.b16 %v56
  %v265 = vunpack.c.h.b16 %v56
  %v266 = vunpack.c.l.b16 %v57
  %v267 = vunpack.c.h.b16 %v57
  %v268 = vunpack.c.l.b16 %v58
  %v269 = vunpack.c.h.b16 %v58
  %v270 = vunpack.c.l.b16 %v59
  %v271 = vunpack.c.h.b16 %v59
  %v272 = vunpack.c.l.b16 %v60
  %v273 = vunpack.c.h.b16 %v60
  %v274 = vunpack.c.l.b16 %v61
  %v275 = vunpack.c.h.b16 %v61
  %v276 = vunpack.c.l.b16 %v62
  %v277 = vunpack.c.h.b16 %v62
  %v278 = vunpack.c.l.b16 %v63
  %v279 = vunpack.c.h.b16 %v63
  %v280 = vunpack.c.l.b16 %v64
  %v281 = vunpack.c.h.b16 %v64
  %v282 = vunpack.c.l.b16 %v65
  %v283 = vunpack.c.h.b16 %v65
  %v284 = vunpack.c.l.b16 %v66
  %v285 = vunpack.c.h.b16 %v66
  %v286 = vunpack.c.l.b16 %v67
  %v287 = vunpack.c.h.b16 %v67
  %v288 = vunpack.c.l.b16 %v68
  %v289 = vunpack.c.h.b16 %v68
  %v290 = vunpack.c.l.b16 %v69
  %v291 = vunpack.c.h.b16 %v69
  %v292 = vunpack.c.l.b16 %v70
  %v293 = vunpack.c.h.b16 %v70
  %v294 = vunpack.c.l.b16 %v71
  %v295 = vunpack.c.h.b16 %v71
  %v296 = vunpack.c.l.b16 %v72
  %v297 = vunpack.c.h.b16 %v72
  %v298 = vunpack.c.l.b16 %v73
  %v299 = vunpack.c.h.b16 %v73
  %v300 = vunpack.c.l.b16 %v74
  %v301 = vunpack.c.h.b16 %v74
  %v302 = vunpack.c.l.b16 %v75
  %v303 = vunpack.c.h.b16 %v75
  %v304 = vunpack.c.l.b16 %v76
  %v305 = vunpack.c.h.b16 %v76
  %v306 = vunpack.c.l.b16 %v77
  %v307 = vunpack.c.h.b16 %v77
  %v308 = vunpack.c.l.b16 %v78
  %v309 = vunpack.c.h.b16 %v78
  %v310 = vunpack.c.l.b16 %v79
  %v311 = vunpack.c.h.b16 %v79
  %v312 = vunpack.c.l.b16 %v80
  %v313 = vunpack.c.h.b16 %v80
  %v314 = vunpack.c.l.b16 %v81
  %v315 = vunpack.c.h.b16 %v81
  %v316 = vunpack.c.l.b16 %v82
  %v317 = vunpack.c.h.b16 %v82
  %v318 = vunpack.c.l.b16 %v83
  %v319 = vunpack.c.h.b16 %v83
  %v320 = vunpack.c.l.b16 %v84
  %v321 = vunpack.c.h.b16 %v84
  %v322 = vunpack.c.l.b16 %v85
  %v323 = vunpack.c.h.b16 %v85
  %v324 = vunpack.c.l.b16 %v86
  %v325 = vunpack.c.h.b16 %v86
  %v326 = vunpack.c.l.b16 %v87
  %v327 = vunpack.c.h.b16 %v87
  %v328 = vunpack.c.l.b16 %v88
  %v329 = vunpack.c.h.b16 %v88
  %v330 = vunpack.c.l.b16 %v89
  %v331 = vunpack.c.h.b16 %v89
  %v332 = vunpack.c.l.b16 %v90
  %v333 = vunpack.c.h.b16 %v90
  %v334 = vpack.c.b16 %v194, %v190
  %v335 = vpack.c.b16 %v195, %v191
  %v336 = vpack.c.b16 %v196, %v192
  %v337 = vpack.c.b16 %v197, %v193
  %v338 = vpack.c.b16 %v202, %v198
  %v339 = vpack.c.b16 %v203, %v199
  %v340 = vpack.c.b16 %v204, %v200
  %v341 = vpack.c.b16 %v205, %v201
  %v342 = vpack.c.b16 %v210, %v206
  %v343 = vpack.c.b16 %v211, %v207
  %v344 = vpack.c.b16 %v212, %v208
  %v345 = vpack.c.b16 %v213, %v209
  %v346 = vpack.c.b16 %v218, %v214
  %v347 = vpack.c.b16 %v219, %v215
  %v348 = vpack.c.b16 %v220, %v216
  %v349 = vpack.c.b16 %v221, %v217
  %v350 = vpack.c.b16 %v226, %v222
  %v351 = vpack.c.b16 %v227, %v223
  %v352 = vpack.c.b16 %v228, %v224
  %v353 = vpack.c.b16 %v229, %v225
  %v354 = vpack.c.b16 %v234, %v230
  %v355 = vpack.c.b16 %v235, %v231
  %v356 = vpack.c.b16 %v236, %v232
  %v357 = vpack.c.b16 %v237, %v233
  %v358 = vpack.c.b16 %v242, %v238
  %v359 = vpack.c.b16 %v243, %v239
  %v360 = vpack.c.b16 %v244, %v240
  %v361 = vpack.c.b16 %v245, %v241
  %v362 = vpack.c.b16 %v250, %v246
  %v363 = vpack.c.b16 %v251, %v247
  %v364 = vpack.c.b16 %v252, %v248
  %v365 = vpack.c.b16 %v253, %v249
  %v366 = vpack.c.b16 %v258, %v254
  %v367 = vpack.c.b16 %v259, %v255
  %v368 = vpack.c.b16 %v260, %v256
  %v369 = vpack.c.b16 %v261, %v257
  %v370 = vpack.c.b16 %v266, %v262
  %v371 = vpack.c.b16 %v267, %v263
  %v372 = vpack.c.b16 %v268, %v264
  %v373 = vpack.c.b16 %v269, %v265
  %v374 = vpack.c.b16 %v274, %v270
  %v375 = vpack.c.b16 %v275, %v271
  %v376 = vpack.c.b16 %v276, %v272
  %v377 = vpack.c.b16 %v277, %v273
  %v378 = vpack.c.b16 %v282, %v278
  %v379 = vpack.c.b16 %v283, %v279
  %v380 = vpack.c.b16 %v284, %v280
  %v381 = vpack.c.b16 %v285, %v281
  %v382 = vpack.c.b16 %v290, %v286
  %v383 = vpack.c.b16 %v291, %v287
  %v384 = vpack.c.b16 %v292, %v288
  %v385 = vpack.c.b16 %v293, %v289
  %v386 = vpack.c.b16 %v298, %v294
  %v387 = vpack.c.b16 %v299, %v295
  %v388 = vpack.c.b16 %v300, %v296
  %v389 = vpack.c.b16 %v301, %v297
  %v390 = vpack.c.b16 %v306, %v302
  %v391 = vpack.c.b16 %v307, %v303
  %v392 = vpack.c.b16 %v308, %v304
  %v393 = vpack.c.b16 %v309, %v305
  %v394 = vpack.c.b16 %v314, %v310
  %v395 = vpack.c.b16 %v315, %v311
  %v396 = vpack.c.b16 %v316, %v312
  %v397 = vpack.c.b16 %v317, %v313
  %v398 = vpack.c.b16 %v322, %v318
  %v399 = vpack.c.b16 %v323, %v319
  %v400 = vpack.c.b16 %v324, %v320
  %v401 = vpack.c.b16 %v325, %v321
  %v402 = vpack.c.b16 %v330, %v326
  %v403 = vpack.c.b16 %v331, %v327
  %v404 = vpack.c.b16 %v332, %v328
  %v405 = vpack.c.b16 %v333, %v329
  %vm478 = vcmask 261120
  %v480 = vsel %vm478, %v115, 0
  %482 = vmatprep.subr.bf16.mxu0 %v363
  %483 = vmatpush1.bf16.msra.mxu0 %v362
  %484 = vmatprep.subr.bf16.mxu0 %v359
  %485 = vmatpush1.bf16.msra.mxu0 %v358
  %486 = vmatprep.subr.bf16.mxu0 %v355
  %487 = vmatpush1.bf16.msra.mxu0 %v354
  %488 = vmatprep.subr.bf16.mxu0 %v351
  %489 = vmatpush1.bf16.msra.mxu0 %v350
  %490 = vmatprep.subr.bf16.mxu0 %v347
  %491 = vmatpush1.bf16.msra.mxu0 %v346
  %492 = vmatprep.subr.bf16.mxu0 %v343
  %493 = vmatpush1.bf16.msra.mxu0 %v342
  %494 = vmatprep.subr.bf16.mxu0 %v339
  %495 = vmatpush1.bf16.msra.mxu0 %v338
  %496 = vmatprep.subr.bf16.mxu0 %v335
  %497 = vmatpush1.bf16.msra.mxu0 %v334
  %498 = vmatprep.subr.bf16.mxu0 %v395
  %499 = vmatpush2.bf16.msra.mxu0 %v394
  %500 = vmatprep.subr.bf16.mxu0 %v391
  %501 = vmatpush2.bf16.msra.mxu0 %v390
  %502 = vmatprep.subr.bf16.mxu0 %v387
  %503 = vmatpush2.bf16.msra.mxu0 %v386
  %504 = vmatprep.subr.bf16.mxu0 %v383
  %505 = vmatpush2.bf16.msra.mxu0 %v382
  %506 = vmatprep.subr.bf16.mxu0 %v379
  %507 = vmatpush2.bf16.msra.mxu0 %v378
  %508 = vmatprep.subr.bf16.mxu0 %v375
  %509 = vmatpush2.bf16.msra.mxu0 %v374
  %510 = vmatprep.subr.bf16.mxu0 %v371
  %511 = vmatpush2.bf16.msra.mxu0 %v370
  %512 = vmatprep.subr.bf16.mxu0 %v367
  %513 = vmatpush2.bf16.msra.mxu0 %v366
  %514 = vmatprep.mubr.bf16.mxu0 %v114
  %515 = vmatmul.mubr.bf16.gmra.mxu0 %v113
  %v516 = vpop.f32.mrf.mxu0
  %v517 = vadd.f32 %v96, %v516
  %v518 = vpop.f32.mrf.mxu0
  %v519 = vadd.f32 %v96, %v518
  %v520 = vpop.f32.mrf.mxu0
  %v521 = vadd.f32 %v101, %v520
  %v522 = vpop.f32.mrf.mxu0
  %v523 = vadd.f32 %v101, %v522
  %524 = vdwg.mxu0
  %525 = vmatprep.subr.bf16.mxu0 0
  %526 = vmatpush1.bf16.msra.mxu0 0
  %527 = vmatprep.subr.bf16.mxu0 0
  %528 = vmatpush1.bf16.msra.mxu0 0
  %529 = vmatprep.subr.bf16.mxu0 0
  %530 = vmatpush1.bf16.msra.mxu0 0
  %531 = vmatprep.subr.bf16.mxu0 0
  %532 = vmatpush1.bf16.msra.mxu0 0
  %533 = vmatprep.subr.bf16.mxu0 0
  %534 = vmatpush1.bf16.msra.mxu0 0
  %535 = vmatprep.subr.bf16.mxu0 0
  %536 = vmatpush1.bf16.msra.mxu0 0
  %537 = vmatprep.subr.bf16.mxu0 %v403
  %538 = vmatpush1.bf16.msra.mxu0 %v402
  %539 = vmatprep.subr.bf16.mxu0 %v399
  %540 = vmatpush1.bf16.msra.mxu0 %v398
  %541 = vmatprep.subr.bf16.mxu0 0
  %542 = vmatpush2.bf16.msra.mxu0 0
  %543 = vmatprep.subr.bf16.mxu0 0
  %544 = vmatpush2.bf16.msra.mxu0 0
  %545 = vmatprep.subr.bf16.mxu0 0
  %546 = vmatpush2.bf16.msra.mxu0 0
  %547 = vmatprep.subr.bf16.mxu0 0
  %548 = vmatpush2.bf16.msra.mxu0 0
  %549 = vmatprep.subr.bf16.mxu0 0
  %550 = vmatpush2.bf16.msra.mxu0 0
  %551 = vmatprep.subr.bf16.mxu0 0
  %552 = vmatpush2.bf16.msra.mxu0 0
  %553 = vmatprep.subr.bf16.mxu0 0
  %554 = vmatpush2.bf16.msra.mxu0 0
  %555 = vmatprep.subr.bf16.mxu0 0
  %556 = vmatpush2.bf16.msra.mxu0 0
  %557 = vmatprep.mubr.bf16.mxu0 0
  %558 = vmatmul.mubr.bf16.gmra.mxu0 %v480
  %v559 = vpop.f32.mrf.mxu0
  %v560 = vadd.f32 %v517, %v559
  %v561 = vpop.f32.mrf.mxu0
  %v562 = vadd.f32 %v519, %v561
  %v563 = vpop.f32.mrf.mxu0
  %v564 = vadd.f32 %v521, %v563
  %v565 = vpop.f32.mrf.mxu0
  %v566 = vadd.f32 %v523, %v565
  %567 = vdwg.mxu0
  %568 = vmatprep.subr.bf16.mxu0 %v365
  %569 = vmatpush1.bf16.msra.mxu0 %v364
  %570 = vmatprep.subr.bf16.mxu0 %v361
  %571 = vmatpush1.bf16.msra.mxu0 %v360
  %572 = vmatprep.subr.bf16.mxu0 %v357
  %573 = vmatpush1.bf16.msra.mxu0 %v356
  %574 = vmatprep.subr.bf16.mxu0 %v353
  %575 = vmatpush1.bf16.msra.mxu0 %v352
  %576 = vmatprep.subr.bf16.mxu0 %v349
  %577 = vmatpush1.bf16.msra.mxu0 %v348
  %578 = vmatprep.subr.bf16.mxu0 %v345
  %579 = vmatpush1.bf16.msra.mxu0 %v344
  %580 = vmatprep.subr.bf16.mxu0 %v341
  %581 = vmatpush1.bf16.msra.mxu0 %v340
  %582 = vmatprep.subr.bf16.mxu0 %v337
  %583 = vmatpush1.bf16.msra.mxu0 %v336
  %584 = vmatprep.subr.bf16.mxu0 %v397
  %585 = vmatpush2.bf16.msra.mxu0 %v396
  %586 = vmatprep.subr.bf16.mxu0 %v393
  %587 = vmatpush2.bf16.msra.mxu0 %v392
  %588 = vmatprep.subr.bf16.mxu0 %v389
  %589 = vmatpush2.bf16.msra.mxu0 %v388
  %590 = vmatprep.subr.bf16.mxu0 %v385
  %591 = vmatpush2.bf16.msra.mxu0 %v384
  %592 = vmatprep.subr.bf16.mxu0 %v381
  %593 = vmatpush2.bf16.msra.mxu0 %v380
  %594 = vmatprep.subr.bf16.mxu0 %v377
  %595 = vmatpush2.bf16.msra.mxu0 %v376
  %596 = vmatprep.subr.bf16.mxu0 %v373
  %597 = vmatpush2.bf16.msra.mxu0 %v372
  %598 = vmatprep.subr.bf16.mxu0 %v369
  %599 = vmatpush2.bf16.msra.mxu0 %v368
  %600 = vmatprep.mubr.bf16.mxu0 %v114
  %601 = vmatmul.mubr.bf16.gmra.mxu0 %v113
  %v602 = vpop.f32.mrf.mxu0
  %v603 = vadd.f32 %v96, %v602
  %v604 = vpop.f32.mrf.mxu0
  %v605 = vadd.f32 %v96, %v604
  %v606 = vpop.f32.mrf.mxu0
  %v607 = vadd.f32 %v101, %v606
  %v608 = vpop.f32.mrf.mxu0
  %v609 = vadd.f32 %v101, %v608
  %610 = vdwg.mxu0
  %611 = vmatprep.subr.bf16.mxu0 0
  %612 = vmatpush1.bf16.msra.mxu0 0
  %613 = vmatprep.subr.bf16.mxu0 0
  %614 = vmatpush1.bf16.msra.mxu0 0
  %615 = vmatprep.subr.bf16.mxu0 0
  %616 = vmatpush1.bf16.msra.mxu0 0
  %617 = vmatprep.subr.bf16.mxu0 0
  %618 = vmatpush1.bf16.msra.mxu0 0
  %619 = vmatprep.subr.bf16.mxu0 0
  %620 = vmatpush1.bf16.msra.mxu0 0
  %621 = vmatprep.subr.bf16.mxu0 0
  %622 = vmatpush1.bf16.msra.mxu0 0
  %623 = vmatprep.subr.bf16.mxu0 %v405
  %624 = vmatpush1.bf16.msra.mxu0 %v404
  %625 = vmatprep.subr.bf16.mxu0 %v401
  %626 = vmatpush1.bf16.msra.mxu0 %v400
  %627 = vmatprep.subr.bf16.mxu0 0
  %628 = vmatpush2.bf16.msra.mxu0 0
  %629 = vmatprep.subr.bf16.mxu0 0
  %630 = vmatpush2.bf16.msra.mxu0 0
  %631 = vmatprep.subr.bf16.mxu0 0
  %632 = vmatpush2.bf16.msra.mxu0 0
  %633 = vmatprep.subr.bf16.mxu0 0
  %634 = vmatpush2.bf16.msra.mxu0 0
  %635 = vmatprep.subr.bf16.mxu0 0
  %636 = vmatpush2.bf16.msra.mxu0 0
  %637 = vmatprep.subr.bf16.mxu0 0
  %638 = vmatpush2.bf16.msra.mxu0 0
  %639 = vmatprep.subr.bf16.mxu0 0
  %640 = vmatpush2.bf16.msra.mxu0 0
  %641 = vmatprep.subr.bf16.mxu0 0
  %642 = vmatpush2.bf16.msra.mxu0 0
  %643 = vmatprep.mubr.bf16.mxu0 0
  %644 = vmatmul.mubr.bf16.gmra.mxu0 %v480
  %v645 = vpop.f32.mrf.mxu0
  %v646 = vadd.f32 %v603, %v645
  %v647 = vpop.f32.mrf.mxu0
  %v648 = vadd.f32 %v605, %v647
  %v649 = vpop.f32.mrf.mxu0
  %v650 = vadd.f32 %v607, %v649
  %v651 = vpop.f32.mrf.mxu0
  %v652 = vadd.f32 %v609, %v651
  %653 = vdwg.mxu0
  %v654 = vmax.f32 %v560, 0.0
  %v655 = vmax.f32 %v562, 0.0
  %v656 = vmax.f32 %v646, 0.0
  %v657 = vmax.f32 %v648, 0.0
  %v658 = vmax.f32 %v564, 0.0
  %v659 = vmax.f32 %v566, 0.0
  %v660 = vmax.f32 %v650, 0.0
  %v661 = vmax.f32 %v652, 0.0
  %662 = vst [vmem:[%s3] sm:$0xff] %v654
  %663 = vst [vmem:[%s3 + $0x8] sm:$0xff] %v655
  %664 = vst [vmem:[%s3 + $0x10] sm:$0xff] %v656
  %665 = vst [vmem:[%s3 + $0x18] sm:$0xff] %v657
  %666 = vst [vmem:[%s3 + $0x20] sm:$0xff] %v658
  %667 = vst [vmem:[%s3 + $0x28] sm:$0xff] %v659
  %668 = vst [vmem:[%s3 + $0x30] sm:$0xff] %v660
  %669 = vst [vmem:[%s3 + $0x38] sm:$0xff] %v661
  // Predicated region
  $region14: #{cgan_forward.16} parent=0 // pred_check
    _
  $region15: #{cgan_forward.16} parent=0 // pred_check_branch
    %671 = sbr.rel (0) target = $region17
  $region16: #{cgan_forward.16} parent=0 // pred_region
    _
  $region17: #{cgan_forward.16} parent=0 // pred_fallthru
    _
  // Predicated region
  $region18: #{cgan_forward.16} parent=0 // pred_check
    _
  $region19: #{cgan_forward.16} parent=0 // pred_check_branch
    %673 = sbr.rel (0) target = $region21
  $region20: #{cgan_forward.16} parent=0 // pred_region
    _
  $region21: #{cgan_forward.16} parent=0 // pred_fallthru
    _

// kernel: cgan_forward.18
$region0: #{cgan_forward.18}
  #allocation0 [shape = 'u32[]', space=smem, size = 0x4, offset = 0x4, fixed_abs, tag = 'smem constant byte address 0x4 - core index']
  #allocation1 [shape = 'u32[144,128]{1,0:T(1,128)}', space=vmem, size = 0x12000, scoped, tag = 'internal scratch']
  %s0 = inlined_call_operand.vmem [shape: bf16[2,16], index: 0, kind: input, shape index: {}]
  %s1 = inlined_call_operand.vmem [shape: bf16[16,512], index: 1, kind: input, shape index: {}]
  %s2 = inlined_call_operand.vmem [shape: f32[2,1], index: 2, kind: input, shape index: {}]
  %s3 = inlined_call_operand.vmem [shape: f32[2,512], index: 3, kind: output, shape index: {}]
  %s4 = sld [smem:[#allocation0]]
  $region22: #{cgan_forward.18} parent=0
    _
  %s6 = ssub.s32 1, %s4
  %s7 = scalar_select 0, %s6, %s4
  // Predicated region
  $region2: #{cgan_forward.18} parent=0 // pred_check
    _
  $region3: #{cgan_forward.18} parent=0 // pred_check_branch
    %9 = sbr.rel (0) target = $region5
  $region4: #{cgan_forward.18} parent=0 // pred_region
    _
  $region5: #{cgan_forward.18} parent=0 // pred_fallthru
    _
  // Predicated region
  $region6: #{cgan_forward.18} parent=0 // pred_check
    _
  $region7: #{cgan_forward.18} parent=0 // pred_check_branch
    %11 = sbr.rel (0) target = $region9
  $region8: #{cgan_forward.18} parent=0 // pred_region
    _
  $region9: #{cgan_forward.18} parent=0 // pred_fallthru
    _
  // Predicated region
  $region10: #{cgan_forward.18} parent=0 // pred_check
    _
  $region11: #{cgan_forward.18} parent=0 // pred_check_branch
    %13 = sbr.rel (0) target = $region13
  $region12: #{cgan_forward.18} parent=0 // pred_region
    _
  $region13: #{cgan_forward.18} parent=0 // pred_fallthru
    _
  %v15 = vld [vmem:[%s0] sm:$0x1]
  %v16 = vld [vmem:[%s1] sm:$0xff]
  %v17 = vld [vmem:[%s1 + $0x8] sm:$0xff]
  %v18 = vld [vmem:[%s1 + $0x10] sm:$0xff]
  %v19 = vld [vmem:[%s1 + $0x18] sm:$0xff]
  %v20 = vld [vmem:[%s2] sm:$0x3]
  %22 = vset.pattern.permute.xlu0 0
  %23 = vperm.xlu0 %22, %v20
  %v24 = vpop.permute.xlu0 %23
  %v30 = vunpack.c.l.b16 %v16
  %v31 = vunpack.c.h.b16 %v16
  %v32 = vunpack.c.l.b16 %v17
  %v33 = vunpack.c.h.b16 %v17
  %v34 = vunpack.c.l.b16 %v18
  %v35 = vunpack.c.h.b16 %v18
  %v36 = vunpack.c.l.b16 %v19
  %v37 = vunpack.c.h.b16 %v19
  %v38 = vpack.c.b16 %v34, %v30
  %v39 = vpack.c.b16 %v35, %v31
  %v40 = vpack.c.b16 %v36, %v32
  %v41 = vpack.c.b16 %v37, %v33
  %vm46 = vcmask 130048
  %v48 = vsel %vm46, %v15, 0
  %50 = vmatprep.subr.bf16.mxu0 0
  %51 = vmatpush1.bf16.msra.mxu0 0
  %52 = vmatprep.subr.bf16.mxu0 0
  %53 = vmatpush1.bf16.msra.mxu0 0
  %54 = vmatprep.subr.bf16.mxu0 0
  %55 = vmatpush1.bf16.msra.mxu0 0
  %56 = vmatprep.subr.bf16.mxu0 0
  %57 = vmatpush1.bf16.msra.mxu0 0
  %58 = vmatprep.subr.bf16.mxu0 0
  %59 = vmatpush1.bf16.msra.mxu0 0
  %60 = vmatprep.subr.bf16.mxu0 0
  %61 = vmatpush1.bf16.msra.mxu0 0
  %62 = vmatprep.subr.bf16.mxu0 0
  %63 = vmatpush1.bf16.msra.mxu0 0
  %64 = vmatprep.subr.bf16.mxu0 %v39
  %65 = vmatpush1.bf16.msra.mxu0 %v38
  %66 = vmatprep.subr.bf16.mxu0 0
  %67 = vmatpush2.bf16.msra.mxu0 0
  %68 = vmatprep.subr.bf16.mxu0 0
  %69 = vmatpush2.bf16.msra.mxu0 0
  %70 = vmatprep.subr.bf16.mxu0 0
  %71 = vmatpush2.bf16.msra.mxu0 0
  %72 = vmatprep.subr.bf16.mxu0 0
  %73 = vmatpush2.bf16.msra.mxu0 0
  %74 = vmatprep.subr.bf16.mxu0 0
  %75 = vmatpush2.bf16.msra.mxu0 0
  %76 = vmatprep.subr.bf16.mxu0 0
  %77 = vmatpush2.bf16.msra.mxu0 0
  %78 = vmatprep.subr.bf16.mxu0 0
  %79 = vmatpush2.bf16.msra.mxu0 0
  %80 = vmatprep.subr.bf16.mxu0 0
  %81 = vmatpush2.bf16.msra.mxu0 0
  %82 = vmatprep.mubr.bf16.mxu0 0
  %83 = vmatmul.mubr.bf16.gmra.mxu0 %v48
  %v84 = vpop.f32.mrf.mxu0
  %v85 = vadd.f32 %v24, %v84
  %v86 = vpop.f32.mrf.mxu0
  %v87 = vadd.f32 %v24, %v86
  %v88 = vpop.f32.mrf.mxu0
  %v89 = vpop.f32.mrf.mxu0
  %90 = vdwg.mxu0
  %91 = vmatprep.subr.bf16.mxu0 0
  %92 = vmatpush1.bf16.msra.mxu0 0
  %93 = vmatprep.subr.bf16.mxu0 0
  %94 = vmatpush1.bf16.msra.mxu0 0
  %95 = vmatprep.subr.bf16.mxu0 0
  %96 = vmatpush1.bf16.msra.mxu0 0
  %97 = vmatprep.subr.bf16.mxu0 0
  %98 = vmatpush1.bf16.msra.mxu0 0
  %99 = vmatprep.subr.bf16.mxu0 0
  %100 = vmatpush1.bf16.msra.mxu0 0
  %101 = vmatprep.subr.bf16.mxu0 0
  %102 = vmatpush1.bf16.msra.mxu0 0
  %103 = vmatprep.subr.bf16.mxu0 0
  %104 = vmatpush1.bf16.msra.mxu0 0
  %105 = vmatprep.subr.bf16.mxu0 %v41
  %106 = vmatpush1.bf16.msra.mxu0 %v40
  %107 = vmatprep.subr.bf16.mxu0 0
  %108 = vmatpush2.bf16.msra.mxu0 0
  %109 = vmatprep.subr.bf16.mxu0 0
  %110 = vmatpush2.bf16.msra.mxu0 0
  %111 = vmatprep.subr.bf16.mxu0 0
  %112 = vmatpush2.bf16.msra.mxu0 0
  %113 = vmatprep.subr.bf16.mxu0 0
  %114 = vmatpush2.bf16.msra.mxu0 0
  %115 = vmatprep.subr.bf16.mxu0 0
  %116 = vmatpush2.bf16.msra.mxu0 0
  %117 = vmatprep.subr.bf16.mxu0 0
  %118 = vmatpush2.bf16.msra.mxu0 0
  %119 = vmatprep.subr.bf16.mxu0 0
  %120 = vmatpush2.bf16.msra.mxu0 0
  %121 = vmatprep.subr.bf16.mxu0 0
  %122 = vmatpush2.bf16.msra.mxu0 0
  %123 = vmatprep.mubr.bf16.mxu0 0
  %124 = vmatmul.mubr.bf16.gmra.mxu0 %v48
  %v125 = vpop.f32.mrf.mxu0
  %v126 = vadd.f32 %v24, %v125
  %v127 = vpop.f32.mrf.mxu0
  %v128 = vadd.f32 %v24, %v127
  %v129 = vpop.f32.mrf.mxu0
  %v130 = vpop.f32.mrf.mxu0
  %131 = vdwg.mxu0
  %v136 = vcombine.low %v85, %v87
  %v137 = vcombine.low %v126, %v128
  %v139 = vunpack.c.l.s4 1983009808
  %v140 = vunpack.c.0.s8 %v139
  %v141 = vlaneseq
  %v142 = vshrl.u32 %v141, 7
  %v143 = vsub.s32 %v140, %v142
  %v144 = vrot.slane %v136, %v143
  %v146 = vunpack.c.l.s4 1983009808
  %v147 = vunpack.c.0.s8 %v146
  %v148 = vlaneseq
  %v149 = vshrl.u32 %v148, 7
  %v150 = vsub.s32 %v147, %v149
  %v151 = vrot.slane %v137, %v150
  %v152 = vcombine.low %v144, %v151
  %154 = vst [vmem:[%s3] sm:$0xff] %v152
  // Predicated region
  $region14: #{cgan_forward.18} parent=0 // pred_check
    _
  $region15: #{cgan_forward.18} parent=0 // pred_check_branch
    %156 = sbr.rel (0) target = $region17
  $region16: #{cgan_forward.18} parent=0 // pred_region
    _
  $region17: #{cgan_forward.18} parent=0 // pred_fallthru
    _
  // Predicated region
  $region18: #{cgan_forward.18} parent=0 // pred_check
    _
  $region19: #{cgan_forward.18} parent=0 // pred_check_branch
    %158 = sbr.rel (0) target = $region21
  $region20: #{cgan_forward.18} parent=0 // pred_region
    _
  $region21: #{cgan_forward.18} parent=0 // pred_fallthru
    _

// kernel: cgan_forward.19
$region0: #{cgan_forward.19}
  #allocation0 [shape = 'u32[]', space=smem, size = 0x4, offset = 0x4, fixed_abs, tag = 'smem constant byte address 0x4 - core index']
  #allocation1 [shape = 'u32[144,128]{1,0:T(1,128)}', space=vmem, size = 0x12000, scoped, tag = 'internal scratch']
  %s0 = inlined_call_operand.vmem [shape: bf16[16,54], index: 0, kind: input, shape index: {}]
  %s1 = inlined_call_operand.vmem [shape: bf16[54,256], index: 1, kind: input, shape index: {}]
  %s2 = inlined_call_operand.vmem [shape: f32[16,1], index: 2, kind: input, shape index: {}]
  %s3 = inlined_call_operand.vmem [shape: f32[16,256], index: 3, kind: output, shape index: {}]
  %s4 = sld [smem:[#allocation0]]
  $region22: #{cgan_forward.19} parent=0
    _
  %s6 = ssub.s32 1, %s4
  %s7 = scalar_select 0, %s6, %s4
  // Predicated region
  $region2: #{cgan_forward.19} parent=0 // pred_check
    _
  $region3: #{cgan_forward.19} parent=0 // pred_check_branch
    %9 = sbr.rel (0) target = $region5
  $region4: #{cgan_forward.19} parent=0 // pred_region
    _
  $region5: #{cgan_forward.19} parent=0 // pred_fallthru
    _
  // Predicated region
  $region6: #{cgan_forward.19} parent=0 // pred_check
    _
  $region7: #{cgan_forward.19} parent=0 // pred_check_branch
    %11 = sbr.rel (0) target = $region9
  $region8: #{cgan_forward.19} parent=0 // pred_region
    _
  $region9: #{cgan_forward.19} parent=0 // pred_fallthru
    _
  // Predicated region
  $region10: #{cgan_forward.19} parent=0 // pred_check
    _
  $region11: #{cgan_forward.19} parent=0 // pred_check_branch
    %13 = sbr.rel (0) target = $region13
  $region12: #{cgan_forward.19} parent=0 // pred_region
    _
  $region13: #{cgan_forward.19} parent=0 // pred_fallthru
    _
  %v15 = vld [vmem:[%s0] sm:$0xf]
  %v16 = vld [vmem:[%s0 + $0x4] sm:$0xf]
  %v17 = vld [vmem:[%s1] sm:$0xff]
  %v18 = vld [vmem:[%s1 + $0x8] sm:$0xff]
  %v19 = vld [vmem:[%s1 + $0x10] sm:$0xff]
  %v20 = vld [vmem:[%s1 + $0x18] sm:$0xff]
  %v21 = vld [vmem:[%s1 + $0x20] sm:$0xff]
  %v22 = vld [vmem:[%s1 + $0x28] sm:$0xff]
  %v23 = vld [vmem:[%s1 + $0x30] sm:$0x77]
  %v24 = vld [vmem:[%s2] sm:$0xff]
  %v25 = vld [vmem:[%s2 + $0x8] sm:$0xff]
  %27 = vset.pattern.permute.xlu0 0
  %28 = vperm.xlu0 %27, %v24
  %v29 = vpop.permute.xlu0 %28
  %32 = vset.pattern.permute.xlu0 0
  %33 = vperm.xlu0 %32, %v25
  %v34 = vpop.permute.xlu0 %33
  %v38 = vunpack.c.l.b16 %v15
  %v39 = vunpack.c.l.b16 %v16
  %v40 = vpack.c.b16 %v39, %v38
  %v48 = vunpack.c.l.b16 %v17
  %v49 = vunpack.c.h.b16 %v17
  %v50 = vunpack.c.l.b16 %v18
  %v51 = vunpack.c.h.b16 %v18
  %v52 = vunpack.c.l.b16 %v19
  %v53 = vunpack.c.h.b16 %v19
  %v54 = vunpack.c.l.b16 %v20
  %v55 = vunpack.c.h.b16 %v20
  %v56 = vunpack.c.l.b16 %v21
  %v57 = vunpack.c.h.b16 %v21
  %v58 = vunpack.c.l.b16 %v22
  %v59 = vunpack.c.h.b16 %v22
  %v60 = vunpack.c.l.b16 %v23
  %v61 = vunpack.c.h.b16 %v23
  %v62 = vpack.c.b16 %v50, %v48
  %v63 = vpack.c.b16 %v51, %v49
  %v64 = vpack.c.b16 %v54, %v52
  %v65 = vpack.c.b16 %v55, %v53
  %v66 = vpack.c.b16 %v58, %v56
  %v67 = vpack.c.b16 %v59, %v57
  %v68 = vpack.c.b16 %v60, %v60
  %v69 = vpack.c.b16 %v61, %v61
  %vm76 = vcmask 441344
  %v78 = vsel %vm76, %v40, 0
  %vm80 = vcmask 1042432
  %v82 = vsel %vm80, %v68, 0
  %v85 = vsel %vm80, %v69, 0
  %87 = vmatprep.subr.bf16.mxu0 0
  %88 = vmatpush1.bf16.msra.mxu0 0
  %89 = vmatprep.subr.bf16.mxu0 0
  %90 = vmatpush1.bf16.msra.mxu0 0
  %91 = vmatprep.subr.bf16.mxu0 0
  %92 = vmatpush1.bf16.msra.mxu0 0
  %93 = vmatprep.subr.bf16.mxu0 0
  %94 = vmatpush1.bf16.msra.mxu0 0
  %95 = vmatprep.subr.bf16.mxu0 %v85
  %96 = vmatpush1.bf16.msra.mxu0 %v82
  %97 = vmatprep.subr.bf16.mxu0 %v67
  %98 = vmatpush1.bf16.msra.mxu0 %v66
  %99 = vmatprep.subr.bf16.mxu0 %v65
  %100 = vmatpush1.bf16.msra.mxu0 %v64
  %101 = vmatprep.subr.bf16.mxu0 %v63
  %102 = vmatpush1.bf16.msra.mxu0 %v62
  %103 = vmatprep.subr.bf16.mxu0 0
  %104 = vmatpush2.bf16.msra.mxu0 0
  %105 = vmatprep.subr.bf16.mxu0 0
  %106 = vmatpush2.bf16.msra.mxu0 0
  %107 = vmatprep.subr.bf16.mxu0 0
  %108 = vmatpush2.bf16.msra.mxu0 0
  %109 = vmatprep.subr.bf16.mxu0 0
  %110 = vmatpush2.bf16.msra.mxu0 0
  %111 = vmatprep.subr.bf16.mxu0 0
  %112 = vmatpush2.bf16.msra.mxu0 0
  %113 = vmatprep.subr.bf16.mxu0 0
  %114 = vmatpush2.bf16.msra.mxu0 0
  %115 = vmatprep.subr.bf16.mxu0 0
  %116 = vmatpush2.bf16.msra.mxu0 0
  %117 = vmatprep.subr.bf16.mxu0 0
  %118 = vmatpush2.bf16.msra.mxu0 0
  %119 = vmatprep.mubr.bf16.mxu0 0
  %120 = vmatmul.mubr.bf16.gmra.mxu0 %v78
  %v121 = vpop.f32.mrf.mxu0
  %v122 = vadd.f32 %v29, %v121
  %v123 = vpop.f32.mrf.mxu0
  %v124 = vadd.f32 %v29, %v123
  %v125 = vpop.f32.mrf.mxu0
  %v126 = vadd.f32 %v34, %v125
  %v127 = vpop.f32.mrf.mxu0
  %v128 = vadd.f32 %v34, %v127
  %129 = vdwg.mxu0
  %vm130 = vcmp.gt.f32.partialorder %v122, 0.0
  %vm131 = vcmp.gt.f32.partialorder %v124, 0.0
  %vm132 = vcmp.gt.f32.partialorder %v126, 0.0
  %vm133 = vcmp.gt.f32.partialorder %v128, 0.0
  %v134 = vmul.f32 %v122, 0.2
  %v135 = vmul.f32 %v124, 0.2
  %v136 = vmul.f32 %v126, 0.2
  %v137 = vmul.f32 %v128, 0.2
  %v138 = vsel %vm130, %v122, %v134
  %v139 = vsel %vm131, %v124, %v135
  %v140 = vsel %vm132, %v126, %v136
  %v141 = vsel %vm133, %v128, %v137
  %142 = vst [vmem:[%s3] sm:$0xff] %v138
  %143 = vst [vmem:[%s3 + $0x8] sm:$0xff] %v139
  %144 = vst [vmem:[%s3 + $0x10] sm:$0xff] %v140
  %145 = vst [vmem:[%s3 + $0x18] sm:$0xff] %v141
  // Predicated region
  $region14: #{cgan_forward.19} parent=0 // pred_check
    _
  $region15: #{cgan_forward.19} parent=0 // pred_check_branch
    %147 = sbr.rel (0) target = $region17
  $region16: #{cgan_forward.19} parent=0 // pred_region
    _
  $region17: #{cgan_forward.19} parent=0 // pred_fallthru
    _
  // Predicated region
  $region18: #{cgan_forward.19} parent=0 // pred_check
    _
  $region19: #{cgan_forward.19} parent=0 // pred_check_branch
    %149 = sbr.rel (0) target = $region21
  $region20: #{cgan_forward.19} parent=0 // pred_region
    _
  $region21: #{cgan_forward.19} parent=0 // pred_fallthru
    _

// kernel: cgan_forward.20
$region0: #{cgan_forward.20}
  #allocation0 [shape = 'u32[]', space=smem, size = 0x4, offset = 0x4, fixed_abs, tag = 'smem constant byte address 0x4 - core index']
  #allocation1 [shape = 'u32[144,128]{1,0:T(1,128)}', space=vmem, size = 0x12000, scoped, tag = 'internal scratch']
  %s0 = inlined_call_operand.vmem [shape: bf16[32,144], index: 0, kind: input, shape index: {}]
  %s1 = inlined_call_operand.vmem [shape: bf16[144,64], index: 1, kind: input, shape index: {}]
  %s2 = inlined_call_operand.vmem [shape: f32[32,1], index: 2, kind: input, shape index: {}]
  %s3 = inlined_call_operand.vmem [shape: f32[32,64], index: 3, kind: output, shape index: {}]
  %s4 = sld [smem:[#allocation0]]
  $region22: #{cgan_forward.20} parent=0
    _
  %s6 = ssub.s32 1, %s4
  %s7 = scalar_select 0, %s6, %s4
  // Predicated region
  $region2: #{cgan_forward.20} parent=0 // pred_check
    _
  $region3: #{cgan_forward.20} parent=0 // pred_check_branch
    %9 = sbr.rel (0) target = $region5
  $region4: #{cgan_forward.20} parent=0 // pred_region
    _
  $region5: #{cgan_forward.20} parent=0 // pred_fallthru
    _
  // Predicated region
  $region6: #{cgan_forward.20} parent=0 // pred_check
    _
  $region7: #{cgan_forward.20} parent=0 // pred_check_branch
    %11 = sbr.rel (0) target = $region9
  $region8: #{cgan_forward.20} parent=0 // pred_region
    _
  $region9: #{cgan_forward.20} parent=0 // pred_fallthru
    _
  // Predicated region
  $region10: #{cgan_forward.20} parent=0 // pred_check
    _
  $region11: #{cgan_forward.20} parent=0 // pred_check_branch
    %13 = sbr.rel (0) target = $region13
  $region12: #{cgan_forward.20} parent=0 // pred_region
    _
  $region13: #{cgan_forward.20} parent=0 // pred_fallthru
    _
  %v15 = vld [vmem:[%s0] sm:$0xff]
  %v16 = vld [vmem:[%s0 + $0x8] sm:$0xff]
  %v17 = vld [vmem:[%s0 + $0x10] sm:$0xff]
  %v18 = vld [vmem:[%s0 + $0x18] sm:$0xff]
  %v19 = vld [vmem:[%s1] sm:$0xf]
  %v20 = vld [vmem:[%s1 + $0x4] sm:$0xf]
  %v21 = vld [vmem:[%s1 + $0x8] sm:$0xf]
  %v22 = vld [vmem:[%s1 + $0xc] sm:$0xf]
  %v23 = vld [vmem:[%s1 + $0x10] sm:$0xf]
  %v24 = vld [vmem:[%s1 + $0x14] sm:$0xf]
  %v25 = vld [vmem:[%s1 + $0x18] sm:$0xf]
  %v26 = vld [vmem:[%s1 + $0x1c] sm:$0xf]
  %v27 = vld [vmem:[%s1 + $0x20] sm:$0xf]
  %v28 = vld [vmem:[%s1 + $0x24] sm:$0xf]
  %v29 = vld [vmem:[%s1 + $0x28] sm:$0xf]
  %v30 = vld [vmem:[%s1 + $0x2c] sm:$0xf]
  %v31 = vld [vmem:[%s1 + $0x30] sm:$0xf]
  %v32 = vld [vmem:[%s1 + $0x34] sm:$0xf]
  %v33 = vld [vmem:[%s1 + $0x38] sm:$0xf]
  %v34 = vld [vmem:[%s1 + $0x3c] sm:$0xf]
  %v35 = vld [vmem:[%s1 + $0x40] sm:$0xf]
  %v36 = vld [vmem:[%s1 + $0x44] sm:$0xf]
  %v37 = vld [vmem:[%s2] sm:$0xff]
  %v38 = vld [vmem:[%s2 + $0x8] sm:$0xff]
  %v39 = vld [vmem:[%s2 + $0x10] sm:$0xff]
  %v40 = vld [vmem:[%s2 + $0x18] sm:$0xff]
  %42 = vset.pattern.permute.xlu0 0
  %43 = vperm.xlu0 %42, %v37
  %v44 = vpop.permute.xlu0 %43
  %47 = vset.pattern.permute.xlu0 0
  %48 = vperm.xlu0 %47, %v38
  %v49 = vpop.permute.xlu0 %48
  %52 = vset.pattern.permute.xlu0 0
  %53 = vperm.xlu0 %52, %v39
  %v54 = vpop.permute.xlu0 %53
  %57 = vset.pattern.permute.xlu0 0
  %58 = vperm.xlu0 %57, %v40
  %v59 = vpop.permute.xlu0 %58
  %v65 = vunpack.c.l.b16 %v15
  %v66 = vunpack.c.h.b16 %v15
  %v67 = vunpack.c.l.b16 %v16
  %v68 = vunpack.c.h.b16 %v16
  %v69 = vunpack.c.l.b16 %v17
  %v70 = vunpack.c.h.b16 %v17
  %v71 = vunpack.c.l.b16 %v18
  %v72 = vunpack.c.h.b16 %v18
  %v73 = vpack.c.b16 %v67, %v65
  %v74 = vpack.c.b16 %v68, %v66
  %v75 = vpack.c.b16 %v71, %v69
  %v76 = vpack.c.b16 %v72, %v70
  %v97 = vunpack.c.l.b16 %v19
  %v98 = vunpack.c.l.b16 %v20
  %v99 = vunpack.c.l.b16 %v21
  %v100 = vunpack.c.l.b16 %v22
  %v101 = vunpack.c.l.b16 %v23
  %v102 = vunpack.c.l.b16 %v24
  %v103 = vunpack.c.l.b16 %v25
  %v104 = vunpack.c.l.b16 %v26
  %v105 = vunpack.c.l.b16 %v27
  %v106 = vunpack.c.l.b16 %v28
  %v107 = vunpack.c.l.b16 %v29
  %v108 = vunpack.c.l.b16 %v30
  %v109 = vunpack.c.l.b16 %v31
  %v110 = vunpack.c.l.b16 %v32
  %v111 = vunpack.c.l.b16 %v33
  %v112 = vunpack.c.l.b16 %v34
  %v113 = vunpack.c.l.b16 %v35
  %v114 = vunpack.c.l.b16 %v36
  %v115 = vpack.c.b16 %v98, %v97
  %v116 = vpack.c.b16 %v100, %v99
  %v117 = vpack.c.b16 %v102, %v101
  %v118 = vpack.c.b16 %v104, %v103
  %v119 = vpack.c.b16 %v106, %v105
  %v120 = vpack.c.b16 %v108, %v107
  %v121 = vpack.c.b16 %v110, %v109
  %v122 = vpack.c.b16 %v112, %v111
  %v123 = vpack.c.b16 %v114, %v113
  %vm133 = vcmask 130048
  %v135 = vsel %vm133, %v74, 0
  %v138 = vsel %vm133, %v76, 0
  %140 = vmatprep.subr.bf16.mxu0 0
  %141 = vmatpush1.bf16.msra.mxu0 %v122
  %142 = vmatprep.subr.bf16.mxu0 0
  %143 = vmatpush1.bf16.msra.mxu0 %v121
  %144 = vmatprep.subr.bf16.mxu0 0
  %145 = vmatpush1.bf16.msra.mxu0 %v120
  %146 = vmatprep.subr.bf16.mxu0 0
  %147 = vmatpush1.bf16.msra.mxu0 %v119
  %148 = vmatprep.subr.bf16.mxu0 0
  %149 = vmatpush1.bf16.msra.mxu0 %v118
  %150 = vmatprep.subr.bf16.mxu0 0
  %151 = vmatpush1.bf16.msra.mxu0 %v117
  %152 = vmatprep.subr.bf16.mxu0 0
  %153 = vmatpush1.bf16.msra.mxu0 %v116
  %154 = vmatprep.subr.bf16.mxu0 0
  %155 = vmatpush1.bf16.msra.mxu0 %v115
  %156 = vmatprep.subr.bf16.mxu0 0
  %157 = vmatpush2.bf16.msra.mxu0 0
  %158 = vmatprep.subr.bf16.mxu0 0
  %159 = vmatpush2.bf16.msra.mxu0 0
  %160 = vmatprep.subr.bf16.mxu0 0
  %161 = vmatpush2.bf16.msra.mxu0 0
  %162 = vmatprep.subr.bf16.mxu0 0
  %163 = vmatpush2.bf16.msra.mxu0 0
  %164 = vmatprep.subr.bf16.mxu0 0
  %165 = vmatpush2.bf16.msra.mxu0 0
  %166 = vmatprep.subr.bf16.mxu0 0
  %167 = vmatpush2.bf16.msra.mxu0 0
  %168 = vmatprep.subr.bf16.mxu0 0
  %169 = vmatpush2.bf16.msra.mxu0 0
  %170 = vmatprep.subr.bf16.mxu0 0
  %171 = vmatpush2.bf16.msra.mxu0 %v123
  %172 = vmatprep.mubr.bf16.mxu0 %v135
  %173 = vmatmul.mubr.bf16.gmra.mxu0 %v73
  %v174 = vpop.f32.mrf.mxu0
  %v175 = vadd.f32 %v44, %v174
  %v176 = vpop.f32.mrf.mxu0
  %v177 = vpop.f32.mrf.mxu0
  %v178 = vadd.f32 %v49, %v177
  %v179 = vpop.f32.mrf.mxu0
  %180 = vmatprep.mubr.bf16.mxu0 %v138
  %181 = vmatmul.mubr.bf16.gmra.mxu0 %v75
  %v182 = vpop.f32.mrf.mxu0
  %v183 = vadd.f32 %v54, %v182
  %v184 = vpop.f32.mrf.mxu0
  %v185 = vpop.f32.mrf.mxu0
  %v186 = vadd.f32 %v59, %v185
  %v187 = vpop.f32.mrf.mxu0
  %188 = vdwg.mxu0
  %vm189 = vcmp.gt.f32.partialorder %v175, 0.0
  %vm190 = vcmp.gt.f32.partialorder %v178, 0.0
  %vm191 = vcmp.gt.f32.partialorder %v183, 0.0
  %vm192 = vcmp.gt.f32.partialorder %v186, 0.0
  %v193 = vmul.f32 %v175, 0.2
  %v194 = vmul.f32 %v178, 0.2
  %v195 = vmul.f32 %v183, 0.2
  %v196 = vmul.f32 %v186, 0.2
  %v197 = vsel %vm189, %v175, %v193
  %v198 = vsel %vm190, %v178, %v194
  %v199 = vsel %vm191, %v183, %v195
  %v200 = vsel %vm192, %v186, %v196
  %vm201 = vcmask 523264
  %202 = vst.msk [vmem:[%s3] sm:$0xff] %vm201, %v197
  %203 = vst.msk [vmem:[%s3 + $0x8] sm:$0xff] %vm201, %v198
  %204 = vst.msk [vmem:[%s3 + $0x10] sm:$0xff] %vm201, %v199
  %205 = vst.msk [vmem:[%s3 + $0x18] sm:$0xff] %vm201, %v200
  // Predicated region
  $region14: #{cgan_forward.20} parent=0 // pred_check
    _
  $region15: #{cgan_forward.20} parent=0 // pred_check_branch
    %207 = sbr.rel (0) target = $region17
  $region16: #{cgan_forward.20} parent=0 // pred_region
    _
  $region17: #{cgan_forward.20} parent=0 // pred_fallthru
    _
  // Predicated region
  $region18: #{cgan_forward.20} parent=0 // pred_check
    _
  $region19: #{cgan_forward.20} parent=0 // pred_check_branch
    %209 = sbr.rel (0) target = $region21
  $region20: #{cgan_forward.20} parent=0 // pred_region
    _
  $region21: #{cgan_forward.20} parent=0 // pred_fallthru
    _

// kernel: cgan_forward.21
$region0: #{cgan_forward.21}
  #allocation0 [shape = 'u32[]', space=smem, size = 0x4, offset = 0x4, fixed_abs, tag = 'smem constant byte address 0x4 - core index']
  #allocation1 [shape = 'u32[144,128]{1,0:T(1,128)}', space=vmem, size = 0x12000, scoped, tag = 'internal scratch']
  #allocation2 [shape = 'f32[1,1]{1,0:T(1,128)S(1)}', space=vmem, size = 0x200, scoped, tag = 'scoped memory for cgan_forward.21']
  %s0 = inlined_call_operand.vmem [shape: bf16[1,32], index: 0, kind: input, shape index: {}]
  %s1 = inlined_call_operand.vmem [shape: bf16[32,64], index: 1, kind: input, shape index: {}]
  %s2 = inlined_call_operand.<no memory space> [shape: f32[1,1], index: 2, kind: input, shape index: {}]
  %s3 = inlined_call_operand.vmem [shape: f32[1,64], index: 3, kind: output, shape index: {}]
  %s4 = sld [smem:[#allocation0]]
  $region22: #{cgan_forward.21} parent=0
    _
  %s6 = ssub.s32 1, %s4
  %s7 = scalar_select 0, %s6, %s4
  %v8 = vstv %s2
  %9 = vst [vmem:[#allocation2] sm:$0x1] %v8
  // Predicated region
  $region2: #{cgan_forward.21} parent=0 // pred_check
    _
  $region3: #{cgan_forward.21} parent=0 // pred_check_branch
    %11 = sbr.rel (0) target = $region5
  $region4: #{cgan_forward.21} parent=0 // pred_region
    _
  $region5: #{cgan_forward.21} parent=0 // pred_fallthru
    _
  // Predicated region
  $region6: #{cgan_forward.21} parent=0 // pred_check
    _
  $region7: #{cgan_forward.21} parent=0 // pred_check_branch
    %13 = sbr.rel (0) target = $region9
  $region8: #{cgan_forward.21} parent=0 // pred_region
    _
  $region9: #{cgan_forward.21} parent=0 // pred_fallthru
    _
  // Predicated region
  $region10: #{cgan_forward.21} parent=0 // pred_check
    _
  $region11: #{cgan_forward.21} parent=0 // pred_check_branch
    %15 = sbr.rel (0) target = $region13
  $region12: #{cgan_forward.21} parent=0 // pred_region
    _
  $region13: #{cgan_forward.21} parent=0 // pred_fallthru
    _
  %v17 = vld [vmem:[%s0] sm:$0x1]
  %v18 = vld [vmem:[%s1] sm:$0xf]
  %v19 = vld [vmem:[%s1 + $0x4] sm:$0xf]
  %v20 = vld [vmem:[%s1 + $0x8] sm:$0xf]
  %v21 = vld [vmem:[%s1 + $0xc] sm:$0xf]
  %v22 = vld [vmem:[#allocation2] sm:$0x1]
  %24 = vset.pattern.permute.xlu0 0
  %25 = vperm.xlu0 %24, %v22
  %v26 = vpop.permute.xlu0 %25
  %v28 = vlaneseq
  %v29 = vshrl.u32 %v28, 7
  %v30 = vsub.s32 0, %v29
  %v31 = vrot.slane %v26, %v30
  %v36 = vunpack.c.l.b16 %v18
  %v37 = vunpack.c.l.b16 %v19
  %v38 = vunpack.c.l.b16 %v20
  %v39 = vunpack.c.l.b16 %v21
  %v40 = vpack.c.b16 %v37, %v36
  %v41 = vpack.c.b16 %v39, %v38
  %vm44 = vcmask 261120
  %v46 = vsel %vm44, %v17, 0
  %48 = vmatprep.subr.bf16.mxu0 0
  %49 = vmatpush1.bf16.msra.mxu0 0
  %50 = vmatprep.subr.bf16.mxu0 0
  %51 = vmatpush1.bf16.msra.mxu0 0
  %52 = vmatprep.subr.bf16.mxu0 0
  %53 = vmatpush1.bf16.msra.mxu0 0
  %54 = vmatprep.subr.bf16.mxu0 0
  %55 = vmatpush1.bf16.msra.mxu0 0
  %56 = vmatprep.subr.bf16.mxu0 0
  %57 = vmatpush1.bf16.msra.mxu0 0
  %58 = vmatprep.subr.bf16.mxu0 0
  %59 = vmatpush1.bf16.msra.mxu0 0
  %60 = vmatprep.subr.bf16.mxu0 0
  %61 = vmatpush1.bf16.msra.mxu0 %v41
  %62 = vmatprep.subr.bf16.mxu0 0
  %63 = vmatpush1.bf16.msra.mxu0 %v40
  %64 = vmatprep.subr.bf16.mxu0 0
  %65 = vmatpush2.bf16.msra.mxu0 0
  %66 = vmatprep.subr.bf16.mxu0 0
  %67 = vmatpush2.bf16.msra.mxu0 0
  %68 = vmatprep.subr.bf16.mxu0 0
  %69 = vmatpush2.bf16.msra.mxu0 0
  %70 = vmatprep.subr.bf16.mxu0 0
  %71 = vmatpush2.bf16.msra.mxu0 0
  %72 = vmatprep.subr.bf16.mxu0 0
  %73 = vmatpush2.bf16.msra.mxu0 0
  %74 = vmatprep.subr.bf16.mxu0 0
  %75 = vmatpush2.bf16.msra.mxu0 0
  %76 = vmatprep.subr.bf16.mxu0 0
  %77 = vmatpush2.bf16.msra.mxu0 0
  %78 = vmatprep.subr.bf16.mxu0 0
  %79 = vmatpush2.bf16.msra.mxu0 0
  %80 = vmatprep.mubr.bf16.mxu0 0
  %81 = vmatmul.mubr.bf16.gmra.mxu0 %v46
  %v82 = vpop.f32.mrf.mxu0
  %v83 = vadd.f32 %v31, %v82
  %v84 = vpop.f32.mrf.mxu0
  %v85 = vpop.f32.mrf.mxu0
  %v86 = vpop.f32.mrf.mxu0
  %87 = vdwg.mxu0
  %v88 = vxor.u32 %v83, 2147483648
  %v89 = vmul.f32 %v88, 1.442695
  %v90 = vpow.pop %v89
  %v91 = vadd.f32 %v90, 1.0
  %v92 = vrcp.pop %v91
  %v93 = vmul.f32 1.0, %v92
  %vm94 = vcmask 516096
  %95 = vst.msk [vmem:[%s3] sm:$0x1] %vm94, %v93
  // Predicated region
  $region14: #{cgan_forward.21} parent=0 // pred_check
    _
  $region15: #{cgan_forward.21} parent=0 // pred_check_branch
    %97 = sbr.rel (0) target = $region17
  $region16: #{cgan_forward.21} parent=0 // pred_region
    _
  $region17: #{cgan_forward.21} parent=0 // pred_fallthru
    _
  // Predicated region
  $region18: #{cgan_forward.21} parent=0 // pred_check
    _
  $region19: #{cgan_forward.21} parent=0 // pred_check_branch
    %99 = sbr.rel (0) target = $region21
  $region20: #{cgan_forward.21} parent=0 // pred_region
    _
  $region21: #{cgan_forward.21} parent=0 // pred_fallthru
    _

</llo_original>
